<compile_context>
chip_gen: v5e
topology: v5e:2x2
jax: 0.10.0
libtpu: 0.0.40
codegen_flags: <defaults>
</compile_context>

<pallas_src>
import jax
import jax.numpy as jnp
from jax.experimental import pallas as pl
from jax.experimental.pallas import tpu as pltpu

K = 5                 # conv kernel size
OC1, OC2 = 10, 20     # real conv output channels
C1P, C2P = 16, 32     # padded conv output channels (lane packing granularity)
HID, OUT = 50, 10     # fc1 / fc2 widths
LANES = 128           # fc lane width / output lane width
K1 = K * 28           # conv1 contraction (H-taps folded):        140
N1 = 2 * 256          # conv1 N: (parity, pw<12 pad 16, oc16)  -> 512
K2 = K * 256          # conv2 contraction (taps x (pw, ic16))  -> 1280
N2 = 2 * 128          # conv2 N: (parity, ow2<4, oc32)         -> 256
_BLOCK_B = 32         # batch tile (kept <= 32 for v7x's 64 MiB VMEM)


# -----------------------------------------------------------------------------
# Pallas kernel (whole forward pass, one batch tile per grid step)
# -----------------------------------------------------------------------------
def _fused_forward_kernel(x_ref, w1_ref, b1_ref, w2_ref, b2_ref,
                          fw1_ref, fb1_ref, fw2_ref, fb2_ref, o_ref):
    tb = x_ref.shape[0]
    x = x_ref[...]                                               # (tb, 28, 28) f32

    # ---- conv1: H-taps folded into the contraction (K = 5*28 = 140), bf16 MXU ----
    xc = jnp.concatenate([x[:, di:di + 24, :] for di in range(K)], axis=-1)
    xc = xc.reshape(tb * 24, K1).astype(jnp.bfloat16)            # (tb*24, 140)
    y1 = jnp.dot(xc, w1_ref[...], preferred_element_type=jnp.float32)   # (tb*24, 512)
    y1 = y1 + b1_ref[...]
    # maxpool 2x2 + relu in the packed lane layout:
    #   lane = parity*256 + pw*16 + oc  ->  W-pool = max of the two 256-lane halves
    y1 = jnp.maximum(y1[:, :256], y1[:, 256:])                   # (tb*24, 256)
    y1 = y1.reshape(tb, 12, 2, 256)                              # rows = (b, h2, hpar)
    y1 = jnp.maximum(y1[:, :, 0, :], y1[:, :, 1, :])             # H-pool -> (tb, 12, 256)
    y1 = jnp.maximum(y1, 0.0)

    # ---- conv2: single im2col matmul, K = 5*256 (taps x (pw, ic16)) --------------
    # TODO(synk): Dropout2d omitted here (identity / eval-mode semantics).
    patch = jnp.concatenate([y1[:, di:di + 8, :] for di in range(K)], axis=-1)
    patch = patch.reshape(tb * 8, K2).astype(jnp.bfloat16)       # (tb*8, 1280)
    y2 = jnp.dot(patch, w2_ref[...], preferred_element_type=jnp.float32)  # (tb*8, 256)
    y2 = y2 + b2_ref[...]
    #   lane = parity*128 + ow2*32 + oc2  ->  W-pool = max of the two 128-lane halves
    y2 = jnp.maximum(y2[:, :128], y2[:, 128:])                   # (tb*8, 128)
    y2 = y2.reshape(tb, 4, 2, 128)                               # rows = (b, oh2, ohpar)
    y2 = jnp.maximum(y2[:, :, 0, :], y2[:, :, 1, :])             # H-pool -> (tb, 4, 128)
    y2 = jnp.maximum(y2, 0.0)

    # ---- flatten (lane = oh2*128 + ow2*32 + oc2) -> fc1 -> relu -> fc2 -----------
    flat = y2.reshape(tb, 4 * 128).astype(jnp.bfloat16)          # (tb, 512)
    h = jnp.dot(flat, fw1_ref[...], preferred_element_type=jnp.float32) + fb1_ref[...]
    h = jnp.maximum(h, 0.0)                                      # (tb, 128) f32
    logits = jnp.dot(h.astype(jnp.bfloat16), fw2_ref[...],
                     preferred_element_type=jnp.float32) + fb2_ref[...]
    # log_softmax kept in f32 (padded logit lanes carry a finite -1e30 bias)
    m = jnp.max(logits, axis=-1, keepdims=True)
    s = logits - m
    lse = jnp.log(jnp.sum(jnp.exp(s), axis=-1, keepdims=True))
    o_ref[...] = s - lse                                         # (tb, 128) lane-dense


# -----------------------------------------------------------------------------
# Host-side weight re-layout (tiny, runs under jit once per call)
# -----------------------------------------------------------------------------
def _prepare_params(params):
    w1, b1, w2, b2, fw1, fb1, fw2, fb2 = params
    f32, bf16 = jnp.float32, jnp.bfloat16

    # conv1 banded weight: rows (di, wi); cols (parity, pw, oc16), w = 2*pw + parity.
    w1t = jnp.transpose(w1[:, 0].astype(f32), (1, 2, 0))         # (di, dj, oc)
    wi = jnp.arange(28)[:, None]
    w_ = jnp.arange(24)[None, :]
    dj = wi - w_                                                 # (28, 24)
    valid = (dj >= 0) & (dj < K)
    m = w1t[:, jnp.clip(dj, 0, K - 1), :]                        # (5, 28, 24, 10)
    m = jnp.where(valid[None, :, :, None], m, 0.0)
    m = jnp.pad(m, ((0, 0), (0, 0), (0, 0), (0, C1P - OC1)))     # (5, 28, 24, 16)
    m = m.reshape(K, 28, 12, 2, C1P).transpose(0, 1, 3, 2, 4)    # (di, wi, par, pw, 16)
    m = m.reshape(K, 28, 2, 12 * C1P)
    m = jnp.pad(m, ((0, 0), (0, 0), (0, 0), (0, 256 - 12 * C1P)))
    w1p = m.reshape(K1, N1).astype(bf16)                         # (140, 512)
    b1_blk = jnp.pad(jnp.tile(jnp.pad(b1.astype(f32), (0, C1P - OC1)), 12),
                     (0, 256 - 12 * C1P))
    b1p = jnp.tile(b1_blk, 2).reshape(1, N1)                     # (1, 512) f32

    # conv2 im2col weight: rows (di, pw, ic16) padded to 256 per tap;
    # cols (parity, ow2, oc32), ow = 2*ow2 + parity, dj = pw - ow.
    w2t = jnp.transpose(w2.astype(f32), (2, 3, 1, 0))            # (di, dj, ic, oc2)
    pw = jnp.arange(12)[:, None]
    ow = jnp.arange(8)[None, :]
    dj2 = pw - ow                                                # (12, 8)
    valid2 = (dj2 >= 0) & (dj2 < K)
    m2 = w2t[:, jnp.clip(dj2, 0, K - 1)]                         # (5, 12, 8, 10, 20)
    m2 = jnp.where(valid2[None, :, :, None, None], m2, 0.0)
    m2 = jnp.pad(m2, ((0, 0), (0, 0), (0, 0), (0, C1P - OC1), (0, C2P - OC2)))
    m2 = m2.transpose(0, 1, 3, 2, 4)                             # (di, pw, ic16, ow, oc32)
    m2 = m2.reshape(K, 12, C1P, 4, 2, C2P).transpose(0, 1, 2, 4, 3, 5)
    m2 = m2.reshape(K, 12 * C1P, N2)                             # (5, 192, 256)
    m2 = jnp.pad(m2, ((0, 0), (0, 256 - 12 * C1P), (0, 0)))      # (5, 256, 256)
    w2p = m2.reshape(K2, N2).astype(bf16)                        # (1280, 256)
    b2p = jnp.tile(jnp.pad(b2.astype(f32), (0, C2P - OC2)), 8).reshape(1, N2)

    # fc1: torch flatten order is (c, h, w); kernel flatten order is (oh2, ow2, oc32)
    t = fw1.astype(f32).reshape(HID, OC2, 4, 4).transpose(2, 3, 1, 0)  # (oh2, ow2, oc2, j)
    t = jnp.pad(t, ((0, 0), (0, 0), (0, C2P - OC2), (0, LANES - HID)))
    fw1p = t.reshape(4 * 4 * C2P, LANES).astype(bf16)            # (512, 128)
    fb1p = jnp.pad(fb1.astype(f32), (0, LANES - HID)).reshape(1, LANES)

    # fc2: padded logit lanes get a -1e30 bias (f32) so they vanish in log_softmax
    fw2p = jnp.pad(fw2.astype(f32).T, ((0, LANES - HID), (0, LANES - OUT))).astype(bf16)
    fb2p = jnp.concatenate(
        [fb2.astype(f32), jnp.full((LANES - OUT,), -1e30, f32)]).reshape(1, LANES)

    return w1p, b1p, w2p, b2p, fw1p, fb1p, fw2p, fb2p


# -----------------------------------------------------------------------------
# Forward pass (single fused pallas_call, batch-tiled grid)
# -----------------------------------------------------------------------------
@jax.jit
def red_neuronal_forward(x_nchw, params):
    B = x_nchw.shape[0]
    tb = min(_BLOCK_B, B)
    bpad = pl.cdiv(B, tb) * tb

    x = x_nchw.reshape(B, 28, 28).astype(jnp.float32)
    if bpad != B:
        x = jnp.pad(x, ((0, bpad - B), (0, 0), (0, 0)))

    weights = _prepare_params(params)
    const2 = lambda i: (0, 0)

    param_bytes = sum(int(a.size) * a.dtype.itemsize for a in weights)
    cost = pl.CostEstimate(
        flops=int(bpad * (2 * 24 * K1 * N1          # conv1 (folded H-taps)
                          + 2 * 8 * K2 * N2          # conv2 (im2col)
                          + 2 * 512 * LANES          # fc1
                          + 2 * LANES * LANES)),     # fc2
        transcendentals=int(bpad * (LANES + 1)),
        bytes_accessed=int(4 * x.size + 4 * bpad * LANES + param_bytes),
    )

    out = pl.pallas_call(
        _fused_forward_kernel,
        out_shape=jax.ShapeDtypeStruct((bpad, LANES), jnp.float32),
        grid=(bpad // tb,),
        in_specs=[
            pl.BlockSpec((tb, 28, 28), lambda i: (i, 0, 0)),     # batch-tiled input
            pl.BlockSpec((K1, N1), const2),                      # VMEM-resident weights
            pl.BlockSpec((1, N1), const2),
            pl.BlockSpec((K2, N2), const2),
            pl.BlockSpec((1, N2), const2),
            pl.BlockSpec((4 * 4 * C2P, LANES), const2),
            pl.BlockSpec((1, LANES), const2),
            pl.BlockSpec((LANES, LANES), const2),
            pl.BlockSpec((1, LANES), const2),
        ],
        out_specs=pl.BlockSpec((tb, LANES), lambda i: (i, 0)),
        compiler_params=pltpu.CompilerParams(
            dimension_semantics=("parallel",),
            vmem_limit_bytes=48 * 1024 * 1024,       # actual use ~6 MiB; safe on v7x
        ),
        cost_estimate=cost,
    )(x, *weights)

    return out[:B, :OUT]


# -----------------------------------------------------------------------------
# Pure-JAX reference (for validation) and deterministic parameter construction
# -----------------------------------------------------------------------------
def _reference_forward(x, params):
    w1, b1, w2, b2, fw1, fb1, fw2, fb2 = params
    dn = ('NCHW', 'OIHW', 'NCHW')
    y = jax.lax.conv_general_dilated(x, w1, (1, 1), 'VALID', dimension_numbers=dn)
    y = y + b1[None, :, None, None]
    y = jax.lax.reduce_window(y, -jnp.inf, jax.lax.max, (1, 1, 2, 2), (1, 1, 2, 2), 'VALID')
    y = jnp.maximum(y, 0.0)
    y = jax.lax.conv_general_dilated(y, w2, (1, 1), 'VALID', dimension_numbers=dn)
    y = y + b2[None, :, None, None]
    y = jax.lax.reduce_window(y, -jnp.inf, jax.lax.max, (1, 1, 2, 2), (1, 1, 2, 2), 'VALID')
    y = jnp.maximum(y, 0.0)
    y = y.reshape(y.shape[0], -1)
    y = jnp.maximum(y @ fw1.T + fb1, 0.0)
    y = y @ fw2.T + fb2
    return jax.nn.log_softmax(y, axis=-1)


def init_params(key):
    def u(k, shape, fan_in):
        bound = 1.0 / jnp.sqrt(jnp.float32(fan_in))
        return jax.random.uniform(k, shape, jnp.float32, -bound, bound)

    ks = jax.random.split(key, 8)
    w1 = u(ks[0], (10, 1, 5, 5), 1 * 5 * 5)
    b1 = u(ks[1], (10,), 1 * 5 * 5)
    w2 = u(ks[2], (20, 10, 5, 5), 10 * 5 * 5)
    b2 = u(ks[3], (20,), 10 * 5 * 5)
    fw1 = u(ks[4], (50, 320), 320)
    fb1 = u(ks[5], (50,), 320)
    fw2 = u(ks[6], (10, 50), 50)
    fb2 = u(ks[7], (10,), 50)
    return (w1, b1, w2, b2, fw1, fb1, fw2, fb2)


if __name__ == "__main__":
    key = jax.random.PRNGKey(0)
    pkey, xkey = jax.random.split(key)
    params = init_params(pkey)

    # MNIST-like input: batch=2, 1 channel, 28x28 (required for the 320-dim flatten)
    x = jax.random.normal(xkey, (2, 1, 28, 28), dtype=jnp.float32)

    out = red_neuronal_forward(x, params)
    out = jax.block_until_ready(out)

    assert out.shape == (2, 10), out.shape
    # log_softmax rows must exponentiate to probabilities summing to ~1
    assert bool(jnp.allclose(jnp.sum(jnp.exp(out), axis=1), 1.0, atol=1e-4))
    # validate against a pure-JAX/XLA f32 reference (tolerance accounts for bf16
    # MXU operands with f32 accumulation)
    ref = _reference_forward(x, params)
    err = float(jnp.max(jnp.abs(out - ref)))
    assert err < 5e-2, err
    print("KERNEL_OK")
</pallas_src>

<mosaic_0001>
module attributes {stable_mosaic.version = 11 : i64} {
  func.func @_fused_forward_kernel(%arg0: i32, %arg1: memref<2x28x28xf32, #tpu.memory_space<vmem>>, %arg2: memref<140x512xbf16, #tpu.memory_space<vmem>>, %arg3: memref<1x512xf32, #tpu.memory_space<vmem>>, %arg4: memref<1280x256xbf16, #tpu.memory_space<vmem>>, %arg5: memref<1x256xf32, #tpu.memory_space<vmem>>, %arg6: memref<512x128xbf16, #tpu.memory_space<vmem>>, %arg7: memref<1x128xf32, #tpu.memory_space<vmem>>, %arg8: memref<128x128xbf16, #tpu.memory_space<vmem>>, %arg9: memref<1x128xf32, #tpu.memory_space<vmem>>, %arg10: memref<2x128xf32, #tpu.memory_space<vmem>>) attributes {dimension_semantics = [#tpu.dimension_semantics<parallel>], iteration_bounds = array<i64: 1>, scalar_prefetch = 0 : i64, scratch_operands = 0 : i64, tpu.core_type = #tpu.core_type<tc>, window_params = [{transform_indices = @transform_0, window_bounds = array<i64: 2, 28, 28>}, {pipeline_mode = #tpu.pipeline_mode<synchronous>, transform_indices = @transform_1, window_bounds = array<i64: 140, 512>}, {pipeline_mode = #tpu.pipeline_mode<synchronous>, transform_indices = @transform_2, window_bounds = array<i64: 1, 512>}, {pipeline_mode = #tpu.pipeline_mode<synchronous>, transform_indices = @transform_3, window_bounds = array<i64: 1280, 256>}, {pipeline_mode = #tpu.pipeline_mode<synchronous>, transform_indices = @transform_4, window_bounds = array<i64: 1, 256>}, {pipeline_mode = #tpu.pipeline_mode<synchronous>, transform_indices = @transform_5, window_bounds = array<i64: 512, 128>}, {pipeline_mode = #tpu.pipeline_mode<synchronous>, transform_indices = @transform_6, window_bounds = array<i64: 1, 128>}, {pipeline_mode = #tpu.pipeline_mode<synchronous>, transform_indices = @transform_7, window_bounds = array<i64: 128, 128>}, {pipeline_mode = #tpu.pipeline_mode<synchronous>, transform_indices = @transform_8, window_bounds = array<i64: 1, 128>}, {transform_indices = @transform_9, window_bounds = array<i64: 2, 128>}]} {
    %c0 = arith.constant 0 : index
    %c0_0 = arith.constant 0 : index
    %c0_1 = arith.constant 0 : index
    %0 = vector.load %arg1[%c0, %c0_0, %c0_1] : memref<2x28x28xf32, #tpu.memory_space<vmem>>, vector<2x28x28xf32>
    %1 = vector.extract_strided_slice %0 {offsets = [0, 0, 0], sizes = [2, 24, 28], strides = [1, 1, 1]} : vector<2x28x28xf32> to vector<2x24x28xf32>
    %2 = vector.extract_strided_slice %0 {offsets = [0, 1, 0], sizes = [2, 24, 28], strides = [1, 1, 1]} : vector<2x28x28xf32> to vector<2x24x28xf32>
    %3 = vector.extract_strided_slice %0 {offsets = [0, 2, 0], sizes = [2, 24, 28], strides = [1, 1, 1]} : vector<2x28x28xf32> to vector<2x24x28xf32>
    %4 = vector.extract_strided_slice %0 {offsets = [0, 3, 0], sizes = [2, 24, 28], strides = [1, 1, 1]} : vector<2x28x28xf32> to vector<2x24x28xf32>
    %5 = vector.extract_strided_slice %0 {offsets = [0, 4, 0], sizes = [2, 24, 28], strides = [1, 1, 1]} : vector<2x28x28xf32> to vector<2x24x28xf32>
    %6 = tpu.concatenate %1, %2, %3, %4, %5 in 2 : vector<2x24x28xf32>, vector<2x24x28xf32>, vector<2x24x28xf32>, vector<2x24x28xf32>, vector<2x24x28xf32> -> vector<2x24x140xf32>
    %7 = vector.shape_cast %6 : vector<2x24x140xf32> to vector<48x140xf32>
    %8 = arith.truncf %7 : vector<48x140xf32> to vector<48x140xbf16>
    %c0_2 = arith.constant 0 : index
    %c0_3 = arith.constant 0 : index
    %9 = vector.load %arg2[%c0_2, %c0_3] : memref<140x512xbf16, #tpu.memory_space<vmem>>, vector<140x512xbf16>
    %cst = arith.constant dense<0.000000e+00> : vector<48x512xf32>
    %10 = tpu.matmul %8, %9, %cst {dimension_numbers = #tpu.dot_dimension_numbers<[1], [0], [0], [1], [0, 0, 1, 1], [], []>} : vector<48x140xbf16>, vector<140x512xbf16>, vector<48x512xf32> -> vector<48x512xf32>
    %c0_4 = arith.constant 0 : index
    %c0_5 = arith.constant 0 : index
    %11 = vector.load %arg3[%c0_4, %c0_5] : memref<1x512xf32, #tpu.memory_space<vmem>>, vector<1x512xf32>
    %12 = vector.broadcast %11 : vector<1x512xf32> to vector<48x512xf32>
    %13 = arith.addf %10, %12 : vector<48x512xf32>
    %14 = vector.extract_strided_slice %13 {offsets = [0, 0], sizes = [48, 256], strides = [1, 1]} : vector<48x512xf32> to vector<48x256xf32>
    %15 = vector.extract_strided_slice %13 {offsets = [0, 256], sizes = [48, 256], strides = [1, 1]} : vector<48x512xf32> to vector<48x256xf32>
    %16 = arith.maximumf %14, %15 : vector<48x256xf32>
    %17 = vector.shape_cast %16 : vector<48x256xf32> to vector<2x12x2x256xf32>
    %18 = vector.extract_strided_slice %17 {offsets = [0, 0, 0, 0], sizes = [2, 12, 1, 256], strides = [1, 1, 1, 1]} : vector<2x12x2x256xf32> to vector<2x12x1x256xf32>
    %19 = vector.shape_cast %18 : vector<2x12x1x256xf32> to vector<2x12x256xf32>
    %20 = vector.extract_strided_slice %17 {offsets = [0, 0, 1, 0], sizes = [2, 12, 1, 256], strides = [1, 1, 1, 1]} : vector<2x12x2x256xf32> to vector<2x12x1x256xf32>
    %21 = vector.shape_cast %20 : vector<2x12x1x256xf32> to vector<2x12x256xf32>
    %22 = arith.maximumf %19, %21 : vector<2x12x256xf32>
    %cst_6 = arith.constant 0.000000e+00 : f32
    %23 = vector.broadcast %cst_6 : f32 to vector<2x12x256xf32>
    %24 = arith.maximumf %22, %23 : vector<2x12x256xf32>
    %25 = vector.extract_strided_slice %24 {offsets = [0, 0, 0], sizes = [2, 8, 256], strides = [1, 1, 1]} : vector<2x12x256xf32> to vector<2x8x256xf32>
    %26 = vector.extract_strided_slice %24 {offsets = [0, 1, 0], sizes = [2, 8, 256], strides = [1, 1, 1]} : vector<2x12x256xf32> to vector<2x8x256xf32>
    %27 = vector.extract_strided_slice %24 {offsets = [0, 2, 0], sizes = [2, 8, 256], strides = [1, 1, 1]} : vector<2x12x256xf32> to vector<2x8x256xf32>
    %28 = vector.extract_strided_slice %24 {offsets = [0, 3, 0], sizes = [2, 8, 256], strides = [1, 1, 1]} : vector<2x12x256xf32> to vector<2x8x256xf32>
    %29 = vector.extract_strided_slice %24 {offsets = [0, 4, 0], sizes = [2, 8, 256], strides = [1, 1, 1]} : vector<2x12x256xf32> to vector<2x8x256xf32>
    %30 = tpu.concatenate %25, %26, %27, %28, %29 in 2 : vector<2x8x256xf32>, vector<2x8x256xf32>, vector<2x8x256xf32>, vector<2x8x256xf32>, vector<2x8x256xf32> -> vector<2x8x1280xf32>
    %31 = vector.shape_cast %30 : vector<2x8x1280xf32> to vector<16x1280xf32>
    %32 = arith.truncf %31 : vector<16x1280xf32> to vector<16x1280xbf16>
    %c0_7 = arith.constant 0 : index
    %c0_8 = arith.constant 0 : index
    %33 = vector.load %arg4[%c0_7, %c0_8] : memref<1280x256xbf16, #tpu.memory_space<vmem>>, vector<1280x256xbf16>
    %cst_9 = arith.constant dense<0.000000e+00> : vector<16x256xf32>
    %34 = tpu.matmul %32, %33, %cst_9 {dimension_numbers = #tpu.dot_dimension_numbers<[1], [0], [0], [1], [0, 0, 1, 1], [], []>} : vector<16x1280xbf16>, vector<1280x256xbf16>, vector<16x256xf32> -> vector<16x256xf32>
    %c0_10 = arith.constant 0 : index
    %c0_11 = arith.constant 0 : index
    %35 = vector.load %arg5[%c0_10, %c0_11] : memref<1x256xf32, #tpu.memory_space<vmem>>, vector<1x256xf32>
    %36 = vector.broadcast %35 : vector<1x256xf32> to vector<16x256xf32>
    %37 = arith.addf %34, %36 : vector<16x256xf32>
    %38 = vector.extract_strided_slice %37 {offsets = [0, 0], sizes = [16, 128], strides = [1, 1]} : vector<16x256xf32> to vector<16x128xf32>
    %39 = vector.extract_strided_slice %37 {offsets = [0, 128], sizes = [16, 128], strides = [1, 1]} : vector<16x256xf32> to vector<16x128xf32>
    %40 = arith.maximumf %38, %39 : vector<16x128xf32>
    %41 = vector.shape_cast %40 : vector<16x128xf32> to vector<2x4x2x128xf32>
    %42 = vector.extract_strided_slice %41 {offsets = [0, 0, 0, 0], sizes = [2, 4, 1, 128], strides = [1, 1, 1, 1]} : vector<2x4x2x128xf32> to vector<2x4x1x128xf32>
    %43 = vector.shape_cast %42 : vector<2x4x1x128xf32> to vector<2x4x128xf32>
    %44 = vector.extract_strided_slice %41 {offsets = [0, 0, 1, 0], sizes = [2, 4, 1, 128], strides = [1, 1, 1, 1]} : vector<2x4x2x128xf32> to vector<2x4x1x128xf32>
    %45 = vector.shape_cast %44 : vector<2x4x1x128xf32> to vector<2x4x128xf32>
    %46 = arith.maximumf %43, %45 : vector<2x4x128xf32>
    %cst_12 = arith.constant 0.000000e+00 : f32
    %47 = vector.broadcast %cst_12 : f32 to vector<2x4x128xf32>
    %48 = arith.maximumf %46, %47 : vector<2x4x128xf32>
    %49 = vector.shape_cast %48 : vector<2x4x128xf32> to vector<2x512xf32>
    %50 = arith.truncf %49 : vector<2x512xf32> to vector<2x512xbf16>
    %c0_13 = arith.constant 0 : index
    %c0_14 = arith.constant 0 : index
    %51 = vector.load %arg6[%c0_13, %c0_14] : memref<512x128xbf16, #tpu.memory_space<vmem>>, vector<512x128xbf16>
    %cst_15 = arith.constant dense<0.000000e+00> : vector<2x128xf32>
    %52 = tpu.matmul %50, %51, %cst_15 {dimension_numbers = #tpu.dot_dimension_numbers<[1], [0], [0], [1], [0, 0, 1, 1], [], []>} : vector<2x512xbf16>, vector<512x128xbf16>, vector<2x128xf32> -> vector<2x128xf32>
    %c0_16 = arith.constant 0 : index
    %c0_17 = arith.constant 0 : index
    %53 = vector.load %arg7[%c0_16, %c0_17] : memref<1x128xf32, #tpu.memory_space<vmem>>, vector<1x128xf32>
    %54 = vector.broadcast %53 : vector<1x128xf32> to vector<2x128xf32>
    %55 = arith.addf %52, %54 : vector<2x128xf32>
    %cst_18 = arith.constant 0.000000e+00 : f32
    %56 = vector.broadcast %cst_18 : f32 to vector<2x128xf32>
    %57 = arith.maximumf %55, %56 : vector<2x128xf32>
    %58 = arith.truncf %57 : vector<2x128xf32> to vector<2x128xbf16>
    %c0_19 = arith.constant 0 : index
    %c0_20 = arith.constant 0 : index
    %59 = vector.load %arg8[%c0_19, %c0_20] : memref<128x128xbf16, #tpu.memory_space<vmem>>, vector<128x128xbf16>
    %cst_21 = arith.constant dense<0.000000e+00> : vector<2x128xf32>
    %60 = tpu.matmul %58, %59, %cst_21 {dimension_numbers = #tpu.dot_dimension_numbers<[1], [0], [0], [1], [0, 0, 1, 1], [], []>} : vector<2x128xbf16>, vector<128x128xbf16>, vector<2x128xf32> -> vector<2x128xf32>
    %c0_22 = arith.constant 0 : index
    %c0_23 = arith.constant 0 : index
    %61 = vector.load %arg9[%c0_22, %c0_23] : memref<1x128xf32, #tpu.memory_space<vmem>>, vector<1x128xf32>
    %62 = vector.broadcast %61 : vector<1x128xf32> to vector<2x128xf32>
    %63 = arith.addf %60, %62 : vector<2x128xf32>
    %cst_24 = arith.constant dense<0xFF800000> : vector<2xf32>
    %64 = vector.multi_reduction <maximumf>, %63, %cst_24 [1] : vector<2x128xf32> to vector<2xf32>
    %65 = vector.shape_cast %64 : vector<2xf32> to vector<2x1xf32>
    %66 = vector.broadcast %65 : vector<2x1xf32> to vector<2x128xf32>
    %67 = arith.subf %63, %66 : vector<2x128xf32>
    %68 = math.exp %67 : vector<2x128xf32>
    %cst_25 = arith.constant dense<0.000000e+00> : vector<2xf32>
    %69 = vector.multi_reduction <add>, %68, %cst_25 [1] : vector<2x128xf32> to vector<2xf32>
    %70 = vector.shape_cast %69 : vector<2xf32> to vector<2x1xf32>
    %71 = math.log %70 : vector<2x1xf32>
    %72 = vector.broadcast %71 : vector<2x1xf32> to vector<2x128xf32>
    %73 = arith.subf %67, %72 : vector<2x128xf32>
    %c0_26 = arith.constant 0 : index
    %c0_27 = arith.constant 0 : index
    %74 = vector.load %arg10[%c0_26, %c0_27] : memref<2x128xf32, #tpu.memory_space<vmem>>, vector<2x128xf32>
    tpu.vector_store %arg10[%c0_26, %c0_27], %73 {strides = array<i32>} : memref<2x128xf32, #tpu.memory_space<vmem>>, vector<2x128xf32>,
    return
  }
  func.func @transform_0(%arg0: i32) -> (i32, i32, i32) {
    %c0_i32 = arith.constant 0 : i32
    %c0_i32_0 = arith.constant 0 : i32
    %c0_i32_1 = arith.constant 0 : i32
    return %arg0, %c0_i32, %c0_i32_0 : i32, i32, i32
  }
  func.func @transform_1(%arg0: i32) -> (i32, i32) {
    %c0_i32 = arith.constant 0 : i32
    %c0_i32_0 = arith.constant 0 : i32
    %c0_i32_1 = arith.constant 0 : i32
    return %c0_i32, %c0_i32_0 : i32, i32
  }
  func.func @transform_2(%arg0: i32) -> (i32, i32) {
    %c0_i32 = arith.constant 0 : i32
    %c0_i32_0 = arith.constant 0 : i32
    %c0_i32_1 = arith.constant 0 : i32
    return %c0_i32, %c0_i32_0 : i32, i32
  }
  func.func @transform_3(%arg0: i32) -> (i32, i32) {
    %c0_i32 = arith.constant 0 : i32
    %c0_i32_0 = arith.constant 0 : i32
    %c0_i32_1 = arith.constant 0 : i32
    return %c0_i32, %c0_i32_0 : i32, i32
  }
  func.func @transform_4(%arg0: i32) -> (i32, i32) {
    %c0_i32 = arith.constant 0 : i32
    %c0_i32_0 = arith.constant 0 : i32
    %c0_i32_1 = arith.constant 0 : i32
    return %c0_i32, %c0_i32_0 : i32, i32
  }
  func.func @transform_5(%arg0: i32) -> (i32, i32) {
    %c0_i32 = arith.constant 0 : i32
    %c0_i32_0 = arith.constant 0 : i32
    %c0_i32_1 = arith.constant 0 : i32
    return %c0_i32, %c0_i32_0 : i32, i32
  }
  func.func @transform_6(%arg0: i32) -> (i32, i32) {
    %c0_i32 = arith.constant 0 : i32
    %c0_i32_0 = arith.constant 0 : i32
    %c0_i32_1 = arith.constant 0 : i32
    return %c0_i32, %c0_i32_0 : i32, i32
  }
  func.func @transform_7(%arg0: i32) -> (i32, i32) {
    %c0_i32 = arith.constant 0 : i32
    %c0_i32_0 = arith.constant 0 : i32
    %c0_i32_1 = arith.constant 0 : i32
    return %c0_i32, %c0_i32_0 : i32, i32
  }
  func.func @transform_8(%arg0: i32) -> (i32, i32) {
    %c0_i32 = arith.constant 0 : i32
    %c0_i32_0 = arith.constant 0 : i32
    %c0_i32_1 = arith.constant 0 : i32
    return %c0_i32, %c0_i32_0 : i32, i32
  }
  func.func @transform_9(%arg0: i32) -> (i32, i32) {
    %c0_i32 = arith.constant 0 : i32
    %c0_i32_0 = arith.constant 0 : i32
    return %arg0, %c0_i32 : i32, i32
  }
}

</mosaic_0001>

<llo_original>
// kernel: tile.18
$region0: #{tile.18}
  #allocation0 [shape = 's32[1]{0}', space=sflag, size = 0x4, scoped, tag = 'scoped memory for tile.18']
  %s0 = inlined_call_operand.vmem [shape: f32[16], index: 0, kind: input, shape index: {}]
  %s1 = inlined_call_operand.vmem [shape: f32[12,16], index: 1, kind: output, shape index: {}]
  // Predicated region
  $region2: #{tile.18} parent=0 // pred_check
    _
  $region3: #{tile.18} parent=0 // pred_check_branch
    %3 = sbr.rel (0) target = $region5
  $region4: #{tile.18} parent=0 // pred_region
    _
  $region5: #{tile.18} parent=0 // pred_fallthru
    _
  %v4 = vld [vmem:[%s0] ss:$0 sm:$0xff]
  %5 = vst [vmem:[%s1] sm:$0xff] %v4
  %s6 = scalar_lea.vmem %s1, 8
  %7 = vst [vmem:[%s6] sm:$0xff] %v4

// kernel: tile.19
$region0: #{tile.19}
  %s0 = inlined_call_operand.vmem [shape: f32[12,16], index: 0, kind: input, shape index: {}]
  %s1 = inlined_call_operand.vmem [shape: f32[192], index: 1, kind: output, shape index: {}]
  $region1: #{tile.19} parent=0
    #allocation0 [shape = 'u8[4096]{0}', space=vmem, size = 0x1000, scoped, tag = 'scoped mem for output reshape']
    %s2 = smov 3
    %v3 = vld [vmem:[%s0] ss:$8 sm:%s2]
    %vm4 = vcmask 130048
    %5 = vst.msk [vmem:[#allocation0] sm:$0x3] %vm4, %v3
    %s6 = scalar_lea.vmem %s0, 7
    %v7 = vld [vmem:[%s6] sm:$0x1]
    %8 = vrot.lane.b32.xlu0 %v7, 112
    %v9 = vpop.permute.xlu0 %8
    %vm10 = vcmask 1048448
    %11 = vst.msk [vmem:[#allocation0] sm:$0x1] %vm10, %v9
    %s12 = scalar_lea.vmem %s0, 6
    %v13 = vld [vmem:[%s12] sm:$0x1]
    %14 = vrot.lane.b32.xlu0 %v13, 96
    %v15 = vpop.permute.xlu0 %14
    %vm16 = vcmask 917248
    %17 = vst.msk [vmem:[#allocation0] sm:$0x1] %vm16, %v15
    %s18 = scalar_lea.vmem %s0, 5
    %v19 = vld [vmem:[%s18] sm:$0x1]
    %20 = vrot.lane.b32.xlu0 %v19, 80
    %v21 = vpop.permute.xlu0 %20
    %vm22 = vcmask 786048
    %23 = vst.msk [vmem:[#allocation0] sm:$0x1] %vm22, %v21
    %s24 = scalar_lea.vmem %s0, 4
    %v25 = vld [vmem:[%s24] sm:$0x1]
    %26 = vrot.lane.b32.xlu0 %v25, 64
    %v27 = vpop.permute.xlu0 %26
    %vm28 = vcmask 654848
    %29 = vst.msk [vmem:[#allocation0] sm:$0x1] %vm28, %v27
    %s30 = scalar_lea.vmem %s0, 3
    %s31 = smov 3
    %v32 = vld [vmem:[%s30] ss:$8 sm:%s31]
    %33 = vrot.lane.b32.xlu0 %v32, 48
    %v34 = vpop.permute.xlu0 %33
    %vm35 = vcmask 523648
    %36 = vst.msk [vmem:[#allocation0] sm:$0x3] %vm35, %v34
    %s37 = scalar_lea.vmem %s0, 2
    %s38 = smov 3
    %v39 = vld [vmem:[%s37] ss:$8 sm:%s38]
    %40 = vrot.lane.b32.xlu0 %v39, 32
    %v41 = vpop.permute.xlu0 %40
    %vm42 = vcmask 392448
    %43 = vst.msk [vmem:[#allocation0] sm:$0x3] %vm42, %v41
    %s44 = scalar_lea.vmem %s0, 1
    %s45 = smov 3
    %v46 = vld [vmem:[%s44] ss:$8 sm:%s45]
    %47 = vrot.lane.b32.xlu0 %v46, 16
    %v48 = vpop.permute.xlu0 %47
    %vm49 = vcmask 261248
    %50 = vst.msk [vmem:[#allocation0] sm:$0x3] %vm49, %v48
    %s52 = ssub.s32 4, 1
    %v53 = vld [vmem:[#allocation0] sm:%s52]
    %s55 = ssub.s32 4, 1
    %56 = vst [vmem:[%s1] sm:%s55] %v53

// kernel: tile.28
$region0: #{tile.28}
  #allocation0 [shape = 's32[1]{0}', space=sflag, size = 0x4, scoped, tag = 'scoped memory for tile.28']
  %s0 = inlined_call_operand.vmem [shape: f32[32], index: 0, kind: input, shape index: {}]
  %s1 = inlined_call_operand.vmem [shape: f32[8,32], index: 1, kind: output, shape index: {}]
  // Predicated region
  $region2: #{tile.28} parent=0 // pred_check
    _
  $region3: #{tile.28} parent=0 // pred_check_branch
    %3 = sbr.rel (0) target = $region5
  $region4: #{tile.28} parent=0 // pred_region
    _
  $region5: #{tile.28} parent=0 // pred_fallthru
    _
  %v4 = vld [vmem:[%s0] ss:$0 sm:$0xff]
  %5 = vst [vmem:[%s1] sm:$0xff] %v4

// kernel: tile.29
$region0: #{tile.29}
  %s0 = inlined_call_operand.vmem [shape: f32[8,32], index: 0, kind: input, shape index: {}]
  %s1 = inlined_call_operand.vmem [shape: f32[1,256], index: 1, kind: output, shape index: {}]
  $region1: #{tile.29} parent=0
    #allocation0 [shape = 'u8[8192]{0}', space=vmem, size = 0x2000, scoped, tag = 'scoped mem for output reshape']
    %s2 = smov 3
    %v3 = vld [vmem:[%s0] ss:$4 sm:%s2]
    %vm4 = vcmask 261120
    %5 = vst.msk [vmem:[#allocation0] ss:$8 sm:$0x3] %vm4, %v3
    %s6 = scalar_lea.vmem %s0, 3
    %s7 = smov 3
    %v8 = vld [vmem:[%s6] ss:$4 sm:%s7]
    %9 = vrot.lane.b32.xlu0 %v8, 96
    %v10 = vpop.permute.xlu0 %9
    %vm11 = vcmask 1048320
    %12 = vst.msk [vmem:[#allocation0] ss:$8 sm:$0x3] %vm11, %v10
    %s13 = scalar_lea.vmem %s0, 2
    %s14 = smov 3
    %v15 = vld [vmem:[%s13] ss:$4 sm:%s14]
    %16 = vrot.lane.b32.xlu0 %v15, 64
    %v17 = vpop.permute.xlu0 %16
    %vm18 = vcmask 785920
    %19 = vst.msk [vmem:[#allocation0] ss:$8 sm:$0x3] %vm18, %v17
    %s20 = scalar_lea.vmem %s0, 1
    %s21 = smov 3
    %v22 = vld [vmem:[%s20] ss:$4 sm:%s21]
    %23 = vrot.lane.b32.xlu0 %v22, 32
    %v24 = vpop.permute.xlu0 %23
    %vm25 = vcmask 523520
    %26 = vst.msk [vmem:[#allocation0] ss:$8 sm:$0x3] %vm25, %v24
    %s28 = ssub.s32 2, 1
    %v29 = vld [vmem:[#allocation0] sm:%s28]
    %s31 = ssub.s32 2, 1
    %32 = vst [vmem:[%s1] sm:%s31] %v29
    %s33 = scalar_lea.vmem [#allocation0], 8
    %v34 = vld [vmem:[%s33] sm:%s28]
    %s36 = ssub.s32 2, 1
    %s37 = scalar_lea.vmem %s1, 1
    %38 = vst [vmem:[%s37] sm:%s36] %v34

// kernel: red_neuronal_forward.1
$region0: #{red_neuronal_forward.1}
  #allocation0 [shape = 'u32[]', space=smem, size = 0x4, offset = 0x4, fixed_abs, tag = 'smem constant byte address 0x4 - core index']
  #allocation1 [shape = 'u32[72,128]{1,0:T(1,128)}', space=vmem, size = 0x9000, scoped, tag = 'internal scratch']
  %s0 = inlined_call_operand.vmem [shape: f32[2,28,28], index: 0, kind: input, shape index: {}]
  %s1 = inlined_call_operand.vmem [shape: bf16[140,512], index: 1, kind: input, shape index: {}]
  %s2 = inlined_call_operand.vmem [shape: f32[1,512], index: 2, kind: input, shape index: {}]
  %s3 = inlined_call_operand.vmem [shape: bf16[1280,256], index: 3, kind: input, shape index: {}]
  %s4 = inlined_call_operand.vmem [shape: f32[1,256], index: 4, kind: input, shape index: {}]
  %s5 = inlined_call_operand.vmem [shape: bf16[512,128], index: 5, kind: input, shape index: {}]
  %s6 = inlined_call_operand.vmem [shape: f32[1,128], index: 6, kind: input, shape index: {}]
  %s7 = inlined_call_operand.vmem [shape: bf16[128,128], index: 7, kind: input, shape index: {}]
  %s8 = inlined_call_operand.vmem [shape: f32[1,128], index: 8, kind: input, shape index: {}]
  %s9 = inlined_call_operand.hbm [shape: f32[2,128], index: 9, kind: output, shape index: {}]
  %s10 = sld [smem:[#allocation0]]
  $region46: #{red_neuronal_forward.1} parent=0
    _
  %s12 = ssub.s32 1, %s10
  %s13 = scalar_select 0, %s12, %s10
  $region1: #{red_neuronal_forward.1} parent=0
    #allocation2 [shape = 'u8[1024]{0}', space=vmem, size = 0x400, scoped, tag = 'output window, operand 0, single buffered']
    #allocation3 [shape = 's32[1]{0}', space=sflag, size = 0x4, scoped, tag = 'scoped memory for red_neuronal_forward.1']
    %14 = vsyncpa [#allocation3], 0
    // Predicated region
    $region2: #{red_neuronal_forward.1} parent=1 // pred_check
      _
    $region3: #{red_neuronal_forward.1} parent=1 // pred_check_branch
      %16 = sbr.rel (0) target = $region5
    $region4: #{red_neuronal_forward.1} parent=1 // pred_region
      _
    $region5: #{red_neuronal_forward.1} parent=1 // pred_fallthru
      _
    // Predicated region
    $region6: #{red_neuronal_forward.1} parent=1 // pred_check
      _
    $region7: #{red_neuronal_forward.1} parent=1 // pred_check_branch
      %18 = sbr.rel (0) target = $region9
    $region8: #{red_neuronal_forward.1} parent=1 // pred_region
      _
    $region9: #{red_neuronal_forward.1} parent=1 // pred_fallthru
      _
    // Predicated region
    $region10: #{red_neuronal_forward.1} parent=1 // pred_check
      _
    $region11: #{red_neuronal_forward.1} parent=1 // pred_check_branch
      %20 = sbr.rel (0) target = $region13
    $region12: #{red_neuronal_forward.1} parent=1 // pred_region
      _
    $region13: #{red_neuronal_forward.1} parent=1 // pred_fallthru
      _
    // Predicated region
    $region14: #{red_neuronal_forward.1} parent=1 // pred_check
      _
    $region15: #{red_neuronal_forward.1} parent=1 // pred_check_branch
      %22 = sbr.rel (0) target = $region17
    $region16: #{red_neuronal_forward.1} parent=1 // pred_region
      _
    $region17: #{red_neuronal_forward.1} parent=1 // pred_fallthru
      _
    // Predicated region
    $region18: #{red_neuronal_forward.1} parent=1 // pred_check
      _
    $region19: #{red_neuronal_forward.1} parent=1 // pred_check_branch
      %24 = sbr.rel (0) target = $region21
    $region20: #{red_neuronal_forward.1} parent=1 // pred_region
      _
    $region21: #{red_neuronal_forward.1} parent=1 // pred_fallthru
      _
    // Predicated region
    $region22: #{red_neuronal_forward.1} parent=1 // pred_check
      _
    $region23: #{red_neuronal_forward.1} parent=1 // pred_check_branch
      %26 = sbr.rel (0) target = $region25
    $region24: #{red_neuronal_forward.1} parent=1 // pred_region
      _
    $region25: #{red_neuronal_forward.1} parent=1 // pred_fallthru
      _
    // Predicated region
    $region26: #{red_neuronal_forward.1} parent=1 // pred_check
      _
    $region27: #{red_neuronal_forward.1} parent=1 // pred_check_branch
      %28 = sbr.rel (0) target = $region29
    $region28: #{red_neuronal_forward.1} parent=1 // pred_region
      _
    $region29: #{red_neuronal_forward.1} parent=1 // pred_fallthru
      _
    // Predicated region
    $region30: #{red_neuronal_forward.1} parent=1 // pred_check
      _
    $region31: #{red_neuronal_forward.1} parent=1 // pred_check_branch
      %30 = sbr.rel (0) target = $region33
    $region32: #{red_neuronal_forward.1} parent=1 // pred_region
      _
    $region33: #{red_neuronal_forward.1} parent=1 // pred_fallthru
      _
    // Predicated region
    $region34: #{red_neuronal_forward.1} parent=1 // pred_check
      _
    $region35: #{red_neuronal_forward.1} parent=1 // pred_check_branch
      %32 = sbr.rel (0) target = $region37
    $region36: #{red_neuronal_forward.1} parent=1 // pred_region
      _
    $region37: #{red_neuronal_forward.1} parent=1 // pred_fallthru
      _
    %v34 = vld [vmem:[%s0] sm:$0xff]
    %v35 = vld [vmem:[%s0 + $0x8] sm:$0xff]
    %v36 = vld [vmem:[%s0 + $0x10] sm:$0xff]
    %v37 = vld [vmem:[%s0 + $0x18] sm:$0xf]
    %v38 = vld [vmem:[%s0 + $0x20] sm:$0xff]
    %v39 = vld [vmem:[%s0 + $0x28] sm:$0xff]
    %v40 = vld [vmem:[%s0 + $0x30] sm:$0xff]
    %v41 = vld [vmem:[%s0 + $0x38] sm:$0xf]
    %vm50 = vcmask 1046528
    %v51 = vrot.slane %v34, 1
    %v52 = vrot.slane %v35, 1
    %v53 = vsel %vm50, %v51, %v52
    %v54 = vrot.slane %v36, 1
    %v55 = vsel %vm50, %v52, %v54
    %v56 = vrot.slane %v37, 1
    %v57 = vsel %vm50, %v54, %v56
    %v58 = vrot.slane %v38, 1
    %v59 = vrot.slane %v39, 1
    %v60 = vsel %vm50, %v58, %v59
    %v61 = vrot.slane %v40, 1
    %v62 = vsel %vm50, %v59, %v61
    %v63 = vrot.slane %v41, 1
    %v64 = vsel %vm50, %v61, %v63
    %65 = vrot.lane.b32.xlu0 %v53, 28
    %v66 = vpop.permute.xlu0 %65
    %67 = vrot.lane.b32.xlu0 %v55, 28
    %v68 = vpop.permute.xlu0 %67
    %69 = vrot.lane.b32.xlu0 %v57, 28
    %v70 = vpop.permute.xlu0 %69
    %71 = vrot.lane.b32.xlu0 %v60, 28
    %v72 = vpop.permute.xlu0 %71
    %73 = vrot.lane.b32.xlu0 %v62, 28
    %v74 = vpop.permute.xlu0 %73
    %75 = vrot.lane.b32.xlu0 %v64, 28
    %v76 = vpop.permute.xlu0 %75
    %vm83 = vcmask 1045504
    %v84 = vrot.slane %v34, 2
    %v85 = vrot.slane %v35, 2
    %v86 = vsel %vm83, %v84, %v85
    %v87 = vrot.slane %v36, 2
    %v88 = vsel %vm83, %v85, %v87
    %v89 = vrot.slane %v37, 2
    %v90 = vsel %vm83, %v87, %v89
    %v91 = vrot.slane %v38, 2
    %v92 = vrot.slane %v39, 2
    %v93 = vsel %vm83, %v91, %v92
    %v94 = vrot.slane %v40, 2
    %v95 = vsel %vm83, %v92, %v94
    %v96 = vrot.slane %v41, 2
    %v97 = vsel %vm83, %v94, %v96
    %98 = vrot.lane.b32.xlu0 %v86, 56
    %v99 = vpop.permute.xlu0 %98
    %100 = vrot.lane.b32.xlu0 %v88, 56
    %v101 = vpop.permute.xlu0 %100
    %102 = vrot.lane.b32.xlu0 %v90, 56
    %v103 = vpop.permute.xlu0 %102
    %104 = vrot.lane.b32.xlu0 %v93, 56
    %v105 = vpop.permute.xlu0 %104
    %106 = vrot.lane.b32.xlu0 %v95, 56
    %v107 = vpop.permute.xlu0 %106
    %108 = vrot.lane.b32.xlu0 %v97, 56
    %v109 = vpop.permute.xlu0 %108
    %vm116 = vcmask 1044480
    %v117 = vrot.slane %v34, 3
    %v118 = vrot.slane %v35, 3
    %v119 = vsel %vm116, %v117, %v118
    %v120 = vrot.slane %v36, 3
    %v121 = vsel %vm116, %v118, %v120
    %v122 = vrot.slane %v37, 3
    %v123 = vsel %vm116, %v120, %v122
    %v124 = vrot.slane %v38, 3
    %v125 = vrot.slane %v39, 3
    %v126 = vsel %vm116, %v124, %v125
    %v127 = vrot.slane %v40, 3
    %v128 = vsel %vm116, %v125, %v127
    %v129 = vrot.slane %v41, 3
    %v130 = vsel %vm116, %v127, %v129
    %131 = vrot.lane.b32.xlu0 %v119, 84
    %v132 = vpop.permute.xlu0 %131
    %133 = vrot.lane.b32.xlu0 %v121, 84
    %v134 = vpop.permute.xlu0 %133
    %135 = vrot.lane.b32.xlu0 %v123, 84
    %v136 = vpop.permute.xlu0 %135
    %137 = vrot.lane.b32.xlu0 %v126, 84
    %v138 = vpop.permute.xlu0 %137
    %139 = vrot.lane.b32.xlu0 %v128, 84
    %v140 = vpop.permute.xlu0 %139
    %141 = vrot.lane.b32.xlu0 %v130, 84
    %v142 = vpop.permute.xlu0 %141
    %vm149 = vcmask 1043456
    %v150 = vrot.slane %v34, 4
    %v151 = vrot.slane %v35, 4
    %v152 = vsel %vm149, %v150, %v151
    %v153 = vrot.slane %v36, 4
    %v154 = vsel %vm149, %v151, %v153
    %v155 = vrot.slane %v37, 4
    %v156 = vsel %vm149, %v153, %v155
    %v157 = vrot.slane %v38, 4
    %v158 = vrot.slane %v39, 4
    %v159 = vsel %vm149, %v157, %v158
    %v160 = vrot.slane %v40, 4
    %v161 = vsel %vm149, %v158, %v160
    %v162 = vrot.slane %v41, 4
    %v163 = vsel %vm149, %v160, %v162
    %164 = vrot.lane.b32.xlu0 %v152, 112
    %v165 = vpop.permute.xlu0 %164
    %166 = vrot.lane.b32.xlu0 %v154, 112
    %v167 = vpop.permute.xlu0 %166
    %168 = vrot.lane.b32.xlu0 %v156, 112
    %v169 = vpop.permute.xlu0 %168
    %170 = vrot.lane.b32.xlu0 %v159, 112
    %v171 = vpop.permute.xlu0 %170
    %172 = vrot.lane.b32.xlu0 %v161, 112
    %v173 = vpop.permute.xlu0 %172
    %174 = vrot.lane.b32.xlu0 %v163, 112
    %v175 = vpop.permute.xlu0 %174
    %vm182 = vcmask 228352
    %v183 = vsel %vm182, %v34, %v66
    %v184 = vsel %vm182, %v35, %v68
    %v185 = vsel %vm182, %v36, %v70
    %v186 = vsel %vm182, %v38, %v72
    %v187 = vsel %vm182, %v39, %v74
    %v188 = vsel %vm182, %v40, %v76
    %vm189 = vcmask 457728
    %v190 = vsel %vm189, %v183, %v99
    %v191 = vsel %vm189, %v184, %v101
    %v192 = vsel %vm189, %v185, %v103
    %v193 = vsel %vm189, %v186, %v105
    %v194 = vsel %vm189, %v187, %v107
    %v195 = vsel %vm189, %v188, %v109
    %vm196 = vcmask 687104
    %v197 = vsel %vm196, %v190, %v132
    %v198 = vsel %vm196, %v191, %v134
    %v199 = vsel %vm196, %v192, %v136
    %v200 = vsel %vm196, %v193, %v138
    %v201 = vsel %vm196, %v194, %v140
    %v202 = vsel %vm196, %v195, %v142
    %vm203 = vcmask 916480
    %v204 = vsel %vm203, %v197, %v165
    %v205 = vsel %vm203, %v198, %v167
    %v206 = vsel %vm203, %v199, %v169
    %v207 = vsel %vm203, %v200, %v171
    %v208 = vsel %vm203, %v201, %v173
    %v209 = vsel %vm203, %v202, %v175
    %v210 = vpack.c.bf16 %v205, %v204
    %v211 = vpack.c.bf16 %v167, %v165
    %v212 = vpack.c.bf16 %v207, %v206
    %v213 = vpack.c.bf16 %v171, %v169
    %v214 = vpack.c.bf16 %v209, %v208
    %v215 = vpack.c.bf16 %v175, %v173
    %v216 = vld [vmem:[%s1] sm:$0xff]
    %v217 = vld [vmem:[%s1 + $0x8] sm:$0xff]
    %v218 = vld [vmem:[%s1 + $0x10] sm:$0xff]
    %v219 = vld [vmem:[%s1 + $0x18] sm:$0xff]
    %v220 = vld [vmem:[%s1 + $0x20] sm:$0xff]
    %v221 = vld [vmem:[%s1 + $0x28] sm:$0xff]
    %v222 = vld [vmem:[%s1 + $0x30] sm:$0xff]
    %v223 = vld [vmem:[%s1 + $0x38] sm:$0xff]
    %v224 = vld [vmem:[%s1 + $0x40] sm:$0xff]
    %v225 = vld [vmem:[%s1 + $0x48] sm:$0xff]
    %v226 = vld [vmem:[%s1 + $0x50] sm:$0xff]
    %v227 = vld [vmem:[%s1 + $0x58] sm:$0xff]
    %v228 = vld [vmem:[%s1 + $0x60] sm:$0xff]
    %v229 = vld [vmem:[%s1 + $0x68] sm:$0xff]
    %v230 = vld [vmem:[%s1 + $0x70] sm:$0xff]
    %v231 = vld [vmem:[%s1 + $0x78] sm:$0xff]
    %v232 = vld [vmem:[%s1 + $0x80] sm:$0xff]
    %v233 = vld [vmem:[%s1 + $0x88] sm:$0xff]
    %v234 = vld [vmem:[%s1 + $0x90] sm:$0xff]
    %v235 = vld [vmem:[%s1 + $0x98] sm:$0xff]
    %v236 = vld [vmem:[%s1 + $0xa0] sm:$0xff]
    %v237 = vld [vmem:[%s1 + $0xa8] sm:$0xff]
    %v238 = vld [vmem:[%s1 + $0xb0] sm:$0xff]
    %v239 = vld [vmem:[%s1 + $0xb8] sm:$0xff]
    %v240 = vld [vmem:[%s1 + $0xc0] sm:$0xff]
    %v241 = vld [vmem:[%s1 + $0xc8] sm:$0xff]
    %v242 = vld [vmem:[%s1 + $0xd0] sm:$0xff]
    %v243 = vld [vmem:[%s1 + $0xd8] sm:$0xff]
    %v244 = vld [vmem:[%s1 + $0xe0] sm:$0xff]
    %v245 = vld [vmem:[%s1 + $0xe8] sm:$0xff]
    %v246 = vld [vmem:[%s1 + $0xf0] sm:$0xff]
    %v247 = vld [vmem:[%s1 + $0xf8] sm:$0xff]
    %v248 = vld [vmem:[%s1 + $0x100] sm:$0xff]
    %v249 = vld [vmem:[%s1 + $0x108] sm:$0xff]
    %v250 = vld [vmem:[%s1 + $0x110] sm:$0x33]
    %v251 = vld [vmem:[%s1 + $0x118] sm:$0x33]
    %v252 = vld [vmem:[%s2] sm:$0xf]
    %v254 = vperm.slane %v252, 0
    %v255 = vperm.slane %v252, 1
    %v256 = vperm.slane %v252, 2
    %v257 = vperm.slane %v252, 3
    %v298 = vunpack.c.l.b16 %v216
    %v299 = vunpack.c.h.b16 %v216
    %v300 = vunpack.c.l.b16 %v217
    %v301 = vunpack.c.h.b16 %v217
    %v302 = vunpack.c.l.b16 %v218
    %v303 = vunpack.c.h.b16 %v218
    %v304 = vunpack.c.l.b16 %v219
    %v305 = vunpack.c.h.b16 %v219
    %v306 = vunpack.c.l.b16 %v220
    %v307 = vunpack.c.h.b16 %v220
    %v308 = vunpack.c.l.b16 %v221
    %v309 = vunpack.c.h.b16 %v221
    %v310 = vunpack.c.l.b16 %v222
    %v311 = vunpack.c.h.b16 %v222
    %v312 = vunpack.c.l.b16 %v223
    %v313 = vunpack.c.h.b16 %v223
    %v314 = vunpack.c.l.b16 %v224
    %v315 = vunpack.c.h.b16 %v224
    %v316 = vunpack.c.l.b16 %v225
    %v317 = vunpack.c.h.b16 %v225
    %v318 = vunpack.c.l.b16 %v226
    %v319 = vunpack.c.h.b16 %v226
    %v320 = vunpack.c.l.b16 %v227
    %v321 = vunpack.c.h.b16 %v227
    %v322 = vunpack.c.l.b16 %v228
    %v323 = vunpack.c.h.b16 %v228
    %v324 = vunpack.c.l.b16 %v229
    %v325 = vunpack.c.h.b16 %v229
    %v326 = vunpack.c.l.b16 %v230
    %v327 = vunpack.c.h.b16 %v230
    %v328 = vunpack.c.l.b16 %v231
    %v329 = vunpack.c.h.b16 %v231
    %v330 = vunpack.c.l.b16 %v232
    %v331 = vunpack.c.h.b16 %v232
    %v332 = vunpack.c.l.b16 %v233
    %v333 = vunpack.c.h.b16 %v233
    %v334 = vunpack.c.l.b16 %v234
    %v335 = vunpack.c.h.b16 %v234
    %v336 = vunpack.c.l.b16 %v235
    %v337 = vunpack.c.h.b16 %v235
    %v338 = vunpack.c.l.b16 %v236
    %v339 = vunpack.c.h.b16 %v236
    %v340 = vunpack.c.l.b16 %v237
    %v341 = vunpack.c.h.b16 %v237
    %v342 = vunpack.c.l.b16 %v238
    %v343 = vunpack.c.h.b16 %v238
    %v344 = vunpack.c.l.b16 %v239
    %v345 = vunpack.c.h.b16 %v239
    %v346 = vunpack.c.l.b16 %v240
    %v347 = vunpack.c.h.b16 %v240
    %v348 = vunpack.c.l.b16 %v241
    %v349 = vunpack.c.h.b16 %v241
    %v350 = vunpack.c.l.b16 %v242
    %v351 = vunpack.c.h.b16 %v242
    %v352 = vunpack.c.l.b16 %v243
    %v353 = vunpack.c.h.b16 %v243
    %v354 = vunpack.c.l.b16 %v244
    %v355 = vunpack.c.h.b16 %v244
    %v356 = vunpack.c.l.b16 %v245
    %v357 = vunpack.c.h.b16 %v245
    %v358 = vunpack.c.l.b16 %v246
    %v359 = vunpack.c.h.b16 %v246
    %v360 = vunpack.c.l.b16 %v247
    %v361 = vunpack.c.h.b16 %v247
    %v362 = vunpack.c.l.b16 %v248
    %v363 = vunpack.c.h.b16 %v248
    %v364 = vunpack.c.l.b16 %v249
    %v365 = vunpack.c.h.b16 %v249
    %v366 = vunpack.c.l.b16 %v250
    %v367 = vunpack.c.h.b16 %v250
    %v368 = vunpack.c.l.b16 %v251
    %v369 = vunpack.c.h.b16 %v251
    %v370 = vpack.c.b16 %v302, %v298
    %v371 = vpack.c.b16 %v303, %v299
    %v372 = vpack.c.b16 %v304, %v300
    %v373 = vpack.c.b16 %v305, %v301
    %v374 = vpack.c.b16 %v310, %v306
    %v375 = vpack.c.b16 %v311, %v307
    %v376 = vpack.c.b16 %v312, %v308
    %v377 = vpack.c.b16 %v313, %v309
    %v378 = vpack.c.b16 %v318, %v314
    %v379 = vpack.c.b16 %v319, %v315
    %v380 = vpack.c.b16 %v320, %v316
    %v381 = vpack.c.b16 %v321, %v317
    %v382 = vpack.c.b16 %v326, %v322
    %v383 = vpack.c.b16 %v327, %v323
    %v384 = vpack.c.b16 %v328, %v324
    %v385 = vpack.c.b16 %v329, %v325
    %v386 = vpack.c.b16 %v334, %v330
    %v387 = vpack.c.b16 %v335, %v331
    %v388 = vpack.c.b16 %v336, %v332
    %v389 = vpack.c.b16 %v337, %v333
    %v390 = vpack.c.b16 %v342, %v338
    %v391 = vpack.c.b16 %v343, %v339
    %v392 = vpack.c.b16 %v344, %v340
    %v393 = vpack.c.b16 %v345, %v341
    %v394 = vpack.c.b16 %v350, %v346
    %v395 = vpack.c.b16 %v351, %v347
    %v396 = vpack.c.b16 %v352, %v348
    %v397 = vpack.c.b16 %v353, %v349
    %v398 = vpack.c.b16 %v358, %v354
    %v399 = vpack.c.b16 %v359, %v355
    %v400 = vpack.c.b16 %v360, %v356
    %v401 = vpack.c.b16 %v361, %v357
    %v402 = vpack.c.b16 %v366, %v362
    %v403 = vpack.c.b16 %v367, %v363
    %v404 = vpack.c.b16 %v368, %v364
    %v405 = vpack.c.b16 %v369, %v365
    %vm438 = vcmask 97280
    %v440 = vsel %vm438, %v211, 0
    %v443 = vsel %vm438, %v213, 0
    %v446 = vsel %vm438, %v215, 0
    %v449 = vsel %vm83, %v402, 0
    %v452 = vsel %vm83, %v403, 0
    %v455 = vsel %vm83, %v404, 0
    %v458 = vsel %vm83, %v405, 0
    %460 = vmatpush.bf16.msra.mxu0 %v398
    %461 = vmatpush.bf16.msra.mxu0 %v394
    %462 = vmatpush.bf16.msra.mxu0 %v390
    %463 = vmatpush.bf16.msra.mxu0 %v386
    %464 = vmatpush.bf16.msra.mxu0 %v382
    %465 = vmatpush.bf16.msra.mxu0 %v378
    %466 = vmatpush.bf16.msra.mxu0 %v374
    %467 = vmatpush.bf16.msra.mxu0 %v370
    %468 = vmatmul.bf16.gmra.mxu0 %v210
    %v469 = vpop.f32.mrf.mxu0
    %v470 = vadd.f32 %v254, %v469
    %v471 = vpop.f32.mrf.mxu0
    %v472 = vadd.f32 %v254, %v471
    %473 = vmatmul.bf16.gmra.mxu0 %v212
    %v474 = vpop.f32.mrf.mxu0
    %v475 = vadd.f32 %v254, %v474
    %v476 = vpop.f32.mrf.mxu0
    %v477 = vadd.f32 %v254, %v476
    %478 = vmatmul.bf16.gmra.mxu0 %v214
    %v479 = vpop.f32.mrf.mxu0
    %v480 = vadd.f32 %v254, %v479
    %v481 = vpop.f32.mrf.mxu0
    %v482 = vadd.f32 %v254, %v481
    %483 = vdwg.mxu0
    %484 = vmatpush.bf16.msra.mxu0 0
    %485 = vmatpush.bf16.msra.mxu0 0
    %486 = vmatpush.bf16.msra.mxu0 0
    %487 = vmatpush.bf16.msra.mxu0 0
    %488 = vmatpush.bf16.msra.mxu0 0
    %489 = vmatpush.bf16.msra.mxu0 0
    %490 = vmatpush.bf16.msra.mxu0 0
    %491 = vmatpush.bf16.msra.mxu0 %v449
    %492 = vmatmul.bf16.gmra.mxu0 %v440
    %v493 = vpop.f32.mrf.mxu0
    %v494 = vadd.f32 %v470, %v493
    %v495 = vpop.f32.mrf.mxu0
    %v496 = vadd.f32 %v472, %v495
    %497 = vmatmul.bf16.gmra.mxu0 %v443
    %v498 = vpop.f32.mrf.mxu0
    %v499 = vadd.f32 %v475, %v498
    %v500 = vpop.f32.mrf.mxu0
    %v501 = vadd.f32 %v477, %v500
    %502 = vmatmul.bf16.gmra.mxu0 %v446
    %v503 = vpop.f32.mrf.mxu0
    %v504 = vadd.f32 %v480, %v503
    %v505 = vpop.f32.mrf.mxu0
    %v506 = vadd.f32 %v482, %v505
    %507 = vdwg.mxu0
    %508 = vmatpush.bf16.msra.mxu0 %v399
    %509 = vmatpush.bf16.msra.mxu0 %v395
    %510 = vmatpush.bf16.msra.mxu0 %v391
    %511 = vmatpush.bf16.msra.mxu0 %v387
    %512 = vmatpush.bf16.msra.mxu0 %v383
    %513 = vmatpush.bf16.msra.mxu0 %v379
    %514 = vmatpush.bf16.msra.mxu0 %v375
    %515 = vmatpush.bf16.msra.mxu0 %v371
    %516 = vmatmul.bf16.gmra.mxu0 %v210
    %v517 = vpop.f32.mrf.mxu0
    %v518 = vadd.f32 %v255, %v517
    %v519 = vpop.f32.mrf.mxu0
    %v520 = vadd.f32 %v255, %v519
    %521 = vmatmul.bf16.gmra.mxu0 %v212
    %v522 = vpop.f32.mrf.mxu0
    %v523 = vadd.f32 %v255, %v522
    %v524 = vpop.f32.mrf.mxu0
    %v525 = vadd.f32 %v255, %v524
    %526 = vmatmul.bf16.gmra.mxu0 %v214
    %v527 = vpop.f32.mrf.mxu0
    %v528 = vadd.f32 %v255, %v527
    %v529 = vpop.f32.mrf.mxu0
    %v530 = vadd.f32 %v255, %v529
    %531 = vdwg.mxu0
    %532 = vmatpush.bf16.msra.mxu0 0
    %533 = vmatpush.bf16.msra.mxu0 0
    %534 = vmatpush.bf16.msra.mxu0 0
    %535 = vmatpush.bf16.msra.mxu0 0
    %536 = vmatpush.bf16.msra.mxu0 0
    %537 = vmatpush.bf16.msra.mxu0 0
    %538 = vmatpush.bf16.msra.mxu0 0
    %539 = vmatpush.bf16.msra.mxu0 %v452
    %540 = vmatmul.bf16.gmra.mxu0 %v440
    %v541 = vpop.f32.mrf.mxu0
    %v542 = vadd.f32 %v518, %v541
    %v543 = vpop.f32.mrf.mxu0
    %v544 = vadd.f32 %v520, %v543
    %545 = vmatmul.bf16.gmra.mxu0 %v443
    %v546 = vpop.f32.mrf.mxu0
    %v547 = vadd.f32 %v523, %v546
    %v548 = vpop.f32.mrf.mxu0
    %v549 = vadd.f32 %v525, %v548
    %550 = vmatmul.bf16.gmra.mxu0 %v446
    %v551 = vpop.f32.mrf.mxu0
    %v552 = vadd.f32 %v528, %v551
    %v553 = vpop.f32.mrf.mxu0
    %v554 = vadd.f32 %v530, %v553
    %555 = vdwg.mxu0
    %556 = vmatpush.bf16.msra.mxu0 %v400
    %557 = vmatpush.bf16.msra.mxu0 %v396
    %558 = vmatpush.bf16.msra.mxu0 %v392
    %559 = vmatpush.bf16.msra.mxu0 %v388
    %560 = vmatpush.bf16.msra.mxu0 %v384
    %561 = vmatpush.bf16.msra.mxu0 %v380
    %562 = vmatpush.bf16.msra.mxu0 %v376
    %563 = vmatpush.bf16.msra.mxu0 %v372
    %564 = vmatmul.bf16.gmra.mxu0 %v210
    %v565 = vpop.f32.mrf.mxu0
    %v566 = vadd.f32 %v256, %v565
    %v567 = vpop.f32.mrf.mxu0
    %v568 = vadd.f32 %v256, %v567
    %569 = vmatmul.bf16.gmra.mxu0 %v212
    %v570 = vpop.f32.mrf.mxu0
    %v571 = vadd.f32 %v256, %v570
    %v572 = vpop.f32.mrf.mxu0
    %v573 = vadd.f32 %v256, %v572
    %574 = vmatmul.bf16.gmra.mxu0 %v214
    %v575 = vpop.f32.mrf.mxu0
    %v576 = vadd.f32 %v256, %v575
    %v577 = vpop.f32.mrf.mxu0
    %v578 = vadd.f32 %v256, %v577
    %579 = vdwg.mxu0
    %580 = vmatpush.bf16.msra.mxu0 0
    %581 = vmatpush.bf16.msra.mxu0 0
    %582 = vmatpush.bf16.msra.mxu0 0
    %583 = vmatpush.bf16.msra.mxu0 0
    %584 = vmatpush.bf16.msra.mxu0 0
    %585 = vmatpush.bf16.msra.mxu0 0
    %586 = vmatpush.bf16.msra.mxu0 0
    %587 = vmatpush.bf16.msra.mxu0 %v455
    %588 = vmatmul.bf16.gmra.mxu0 %v440
    %v589 = vpop.f32.mrf.mxu0
    %v590 = vadd.f32 %v566, %v589
    %v591 = vpop.f32.mrf.mxu0
    %v592 = vadd.f32 %v568, %v591
    %593 = vmatmul.bf16.gmra.mxu0 %v443
    %v594 = vpop.f32.mrf.mxu0
    %v595 = vadd.f32 %v571, %v594
    %v596 = vpop.f32.mrf.mxu0
    %v597 = vadd.f32 %v573, %v596
    %598 = vmatmul.bf16.gmra.mxu0 %v446
    %v599 = vpop.f32.mrf.mxu0
    %v600 = vadd.f32 %v576, %v599
    %v601 = vpop.f32.mrf.mxu0
    %v602 = vadd.f32 %v578, %v601
    %603 = vdwg.mxu0
    %604 = vmatpush.bf16.msra.mxu0 %v401
    %605 = vmatpush.bf16.msra.mxu0 %v397
    %606 = vmatpush.bf16.msra.mxu0 %v393
    %607 = vmatpush.bf16.msra.mxu0 %v389
    %608 = vmatpush.bf16.msra.mxu0 %v385
    %609 = vmatpush.bf16.msra.mxu0 %v381
    %610 = vmatpush.bf16.msra.mxu0 %v377
    %611 = vmatpush.bf16.msra.mxu0 %v373
    %612 = vmatmul.bf16.gmra.mxu0 %v210
    %v613 = vpop.f32.mrf.mxu0
    %v614 = vadd.f32 %v257, %v613
    %v615 = vpop.f32.mrf.mxu0
    %v616 = vadd.f32 %v257, %v615
    %617 = vmatmul.bf16.gmra.mxu0 %v212
    %v618 = vpop.f32.mrf.mxu0
    %v619 = vadd.f32 %v257, %v618
    %v620 = vpop.f32.mrf.mxu0
    %v621 = vadd.f32 %v257, %v620
    %622 = vmatmul.bf16.gmra.mxu0 %v214
    %v623 = vpop.f32.mrf.mxu0
    %v624 = vadd.f32 %v257, %v623
    %v625 = vpop.f32.mrf.mxu0
    %v626 = vadd.f32 %v257, %v625
    %627 = vdwg.mxu0
    %628 = vmatpush.bf16.msra.mxu0 0
    %629 = vmatpush.bf16.msra.mxu0 0
    %630 = vmatpush.bf16.msra.mxu0 0
    %631 = vmatpush.bf16.msra.mxu0 0
    %632 = vmatpush.bf16.msra.mxu0 0
    %633 = vmatpush.bf16.msra.mxu0 0
    %634 = vmatpush.bf16.msra.mxu0 0
    %635 = vmatpush.bf16.msra.mxu0 %v458
    %636 = vmatmul.bf16.gmra.mxu0 %v440
    %v637 = vpop.f32.mrf.mxu0
    %v638 = vadd.f32 %v614, %v637
    %v639 = vpop.f32.mrf.mxu0
    %v640 = vadd.f32 %v616, %v639
    %641 = vmatmul.bf16.gmra.mxu0 %v443
    %v642 = vpop.f32.mrf.mxu0
    %v643 = vadd.f32 %v619, %v642
    %v644 = vpop.f32.mrf.mxu0
    %v645 = vadd.f32 %v621, %v644
    %646 = vmatmul.bf16.gmra.mxu0 %v446
    %v647 = vpop.f32.mrf.mxu0
    %v648 = vadd.f32 %v624, %v647
    %v649 = vpop.f32.mrf.mxu0
    %v650 = vadd.f32 %v626, %v649
    %651 = vdwg.mxu0
    %v652 = vmax.f32 %v494, %v590
    %v653 = vmax.f32 %v542, %v638
    %v654 = vmax.f32 %v496, %v592
    %v655 = vmax.f32 %v544, %v640
    %v656 = vmax.f32 %v499, %v595
    %v657 = vmax.f32 %v547, %v643
    %v658 = vmax.f32 %v501, %v597
    %v659 = vmax.f32 %v549, %v645
    %v660 = vmax.f32 %v504, %v600
    %v661 = vmax.f32 %v552, %v648
    %v662 = vmax.f32 %v506, %v602
    %v663 = vmax.f32 %v554, %v650
    %v676 = vrot.slane %v653, 6
    %v677 = vrot.slane %v655, 6
    %v678 = vrot.slane %v657, 6
    %v679 = vrot.slane %v659, 6
    %v680 = vrot.slane %v661, 6
    %v681 = vrot.slane %v663, 6
    %vm682 = vcmask 1041408
    %v683 = vsel %vm682, %v652, %v676
    %vm684 = vcmask 1043458
    %v685 = vsel %vm684, %v652, %v676
    %v686 = vrot.slane %v685, 2
    %vm687 = vcmask 1045508
    %v688 = vsel %vm687, %v652, %v676
    %v689 = vrot.slane %v688, 4
    %v690 = vsel %vm83, %v676, %v652
    %v691 = vrot.slane %v690, 6
    %v692 = vsel %vm682, %v654, %v677
    %v693 = vsel %vm684, %v654, %v677
    %v694 = vrot.slane %v693, 2
    %v695 = vsel %vm687, %v654, %v677
    %v696 = vrot.slane %v695, 4
    %v697 = vsel %vm83, %v677, %v654
    %v698 = vrot.slane %v697, 6
    %v699 = vsel %vm682, %v656, %v678
    %v700 = vsel %vm684, %v656, %v678
    %v701 = vrot.slane %v700, 2
    %v702 = vsel %vm687, %v656, %v678
    %v703 = vrot.slane %v702, 4
    %v704 = vsel %vm83, %v678, %v656
    %v705 = vrot.slane %v704, 6
    %v706 = vsel %vm682, %v658, %v679
    %v707 = vsel %vm684, %v658, %v679
    %v708 = vrot.slane %v707, 2
    %v709 = vsel %vm687, %v658, %v679
    %v710 = vrot.slane %v709, 4
    %v711 = vsel %vm83, %v679, %v658
    %v712 = vrot.slane %v711, 6
    %v713 = vsel %vm682, %v660, %v680
    %v714 = vsel %vm684, %v660, %v680
    %v715 = vrot.slane %v714, 2
    %v716 = vsel %vm687, %v660, %v680
    %v717 = vrot.slane %v716, 4
    %v718 = vsel %vm83, %v680, %v660
    %v719 = vrot.slane %v718, 6
    %v720 = vsel %vm682, %v662, %v681
    %v721 = vsel %vm684, %v662, %v681
    %v722 = vrot.slane %v721, 2
    %v723 = vsel %vm687, %v662, %v681
    %v724 = vrot.slane %v723, 4
    %v725 = vsel %vm83, %v681, %v662
    %v726 = vrot.slane %v725, 6
    %v751 = vrot.slane %v683, 7
    %v752 = vrot.slane %v751, 2
    %v753 = vrot.slane %v686, 7
    %v754 = vrot.slane %v753, 2
    %v755 = vrot.slane %v689, 7
    %v756 = vrot.slane %v755, 2
    %v757 = vrot.slane %v691, 7
    %v758 = vrot.slane %v757, 2
    %v759 = vrot.slane %v692, 7
    %v760 = vrot.slane %v759, 2
    %v761 = vrot.slane %v694, 7
    %v762 = vrot.slane %v761, 2
    %v763 = vrot.slane %v696, 7
    %v764 = vrot.slane %v763, 2
    %v765 = vrot.slane %v698, 7
    %v766 = vrot.slane %v765, 2
    %v767 = vrot.slane %v699, 7
    %v768 = vrot.slane %v767, 2
    %v769 = vrot.slane %v701, 7
    %v770 = vrot.slane %v769, 2
    %v771 = vrot.slane %v703, 7
    %v772 = vrot.slane %v771, 2
    %v773 = vrot.slane %v705, 7
    %v774 = vrot.slane %v773, 2
    %v775 = vrot.slane %v706, 7
    %v776 = vrot.slane %v775, 2
    %v777 = vrot.slane %v708, 7
    %v778 = vrot.slane %v777, 2
    %v779 = vrot.slane %v710, 7
    %v780 = vrot.slane %v779, 2
    %v781 = vrot.slane %v712, 7
    %v782 = vrot.slane %v781, 2
    %v783 = vrot.slane %v713, 7
    %v784 = vrot.slane %v783, 2
    %v785 = vrot.slane %v715, 7
    %v786 = vrot.slane %v785, 2
    %v787 = vrot.slane %v717, 7
    %v788 = vrot.slane %v787, 2
    %v789 = vrot.slane %v719, 7
    %v790 = vrot.slane %v789, 2
    %v791 = vrot.slane %v720, 7
    %v792 = vrot.slane %v791, 2
    %v793 = vrot.slane %v722, 7
    %v794 = vrot.slane %v793, 2
    %v795 = vrot.slane %v724, 7
    %v796 = vrot.slane %v795, 2
    %v797 = vrot.slane %v726, 7
    %v798 = vrot.slane %v797, 2
    %v823 = vmax.f32 %v683, %v752
    %v824 = vmax.f32 %v686, %v754
    %v825 = vmax.f32 %v689, %v756
    %v826 = vmax.f32 %v691, %v758
    %v827 = vmax.f32 %v692, %v760
    %v828 = vmax.f32 %v694, %v762
    %v829 = vmax.f32 %v696, %v764
    %v830 = vmax.f32 %v698, %v766
    %v831 = vmax.f32 %v699, %v768
    %v832 = vmax.f32 %v701, %v770
    %v833 = vmax.f32 %v703, %v772
    %v834 = vmax.f32 %v705, %v774
    %v835 = vmax.f32 %v706, %v776
    %v836 = vmax.f32 %v708, %v778
    %v837 = vmax.f32 %v710, %v780
    %v838 = vmax.f32 %v712, %v782
    %v839 = vmax.f32 %v713, %v784
    %v840 = vmax.f32 %v715, %v786
    %v841 = vmax.f32 %v717, %v788
    %v842 = vmax.f32 %v719, %v790
    %v843 = vmax.f32 %v720, %v792
    %v844 = vmax.f32 %v722, %v794
    %v845 = vmax.f32 %v724, %v796
    %v846 = vmax.f32 %v726, %v798
    %v847 = vmax.f32 %v823, 0.0
    %v848 = vmax.f32 %v824, 0.0
    %v849 = vmax.f32 %v825, 0.0
    %v850 = vmax.f32 %v826, 0.0
    %v851 = vmax.f32 %v827, 0.0
    %v852 = vmax.f32 %v828, 0.0
    %v853 = vmax.f32 %v829, 0.0
    %v854 = vmax.f32 %v830, 0.0
    %v855 = vmax.f32 %v831, 0.0
    %v856 = vmax.f32 %v832, 0.0
    %v857 = vmax.f32 %v833, 0.0
    %v858 = vmax.f32 %v834, 0.0
    %v859 = vmax.f32 %v835, 0.0
    %v860 = vmax.f32 %v836, 0.0
    %v861 = vmax.f32 %v837, 0.0
    %v862 = vmax.f32 %v838, 0.0
    %v863 = vmax.f32 %v839, 0.0
    %v864 = vmax.f32 %v840, 0.0
    %v865 = vmax.f32 %v841, 0.0
    %v866 = vmax.f32 %v842, 0.0
    %v867 = vmax.f32 %v843, 0.0
    %v868 = vmax.f32 %v844, 0.0
    %v869 = vmax.f32 %v845, 0.0
    %v870 = vmax.f32 %v846, 0.0
    %v887 = vperm.slane %v847, 0
    %v888 = vperm.slane %v847, 2
    %v889 = vperm.slane %v848, 0
    %v890 = vperm.slane %v848, 2
    %v891 = vperm.slane %v849, 0
    %v892 = vperm.slane %v849, 2
    %v893 = vperm.slane %v850, 0
    %v894 = vperm.slane %v850, 2
    %v895 = vperm.slane %v851, 0
    %v896 = vperm.slane %v851, 2
    %v897 = vperm.slane %v852, 0
    %v898 = vperm.slane %v852, 2
    %v899 = vperm.slane %v853, 0
    %v900 = vperm.slane %v853, 2
    %v901 = vperm.slane %v854, 0
    %v902 = vperm.slane %v854, 2
    %v903 = vperm.slane %v859, 0
    %v904 = vperm.slane %v859, 2
    %v905 = vperm.slane %v860, 0
    %v906 = vperm.slane %v860, 2
    %v907 = vperm.slane %v861, 0
    %v908 = vperm.slane %v861, 2
    %v909 = vperm.slane %v862, 0
    %v910 = vperm.slane %v862, 2
    %v911 = vperm.slane %v863, 0
    %v912 = vperm.slane %v863, 2
    %v913 = vperm.slane %v864, 0
    %v914 = vperm.slane %v864, 2
    %v915 = vperm.slane %v865, 0
    %v916 = vperm.slane %v865, 2
    %v917 = vperm.slane %v866, 0
    %v918 = vperm.slane %v866, 2
    %vm919 = vcmask 1041409
    %v920 = vsel %vm919, %v889, %v887
    %vm921 = vcmask 1042434
    %v922 = vsel %vm921, %v891, %v920
    %vm923 = vcmask 1043459
    %v924 = vsel %vm923, %v893, %v922
    %vm925 = vcmask 1044484
    %v926 = vsel %vm925, %v895, %v924
    %vm927 = vcmask 1045509
    %v928 = vsel %vm927, %v897, %v926
    %vm929 = vcmask 1046534
    %v930 = vsel %vm929, %v899, %v928
    %vm931 = vcmask 1047559
    %v932 = vsel %vm931, %v901, %v930
    %v933 = vsel %vm919, %v890, %v888
    %v934 = vsel %vm921, %v892, %v933
    %v935 = vsel %vm923, %v894, %v934
    %v936 = vsel %vm925, %v896, %v935
    %v937 = vsel %vm927, %v898, %v936
    %v938 = vsel %vm929, %v900, %v937
    %v939 = vsel %vm931, %v902, %v938
    %v940 = vsel %vm919, %v905, %v903
    %v941 = vsel %vm921, %v907, %v940
    %v942 = vsel %vm923, %v909, %v941
    %v943 = vsel %vm925, %v911, %v942
    %v944 = vsel %vm927, %v913, %v943
    %v945 = vsel %vm929, %v915, %v944
    %v946 = vsel %vm931, %v917, %v945
    %v947 = vsel %vm919, %v906, %v904
    %v948 = vsel %vm921, %v908, %v947
    %v949 = vsel %vm923, %v910, %v948
    %v950 = vsel %vm925, %v912, %v949
    %v951 = vsel %vm927, %v914, %v950
    %v952 = vsel %vm929, %v916, %v951
    %v953 = vsel %vm931, %v918, %v952
    %v960 = vperm.slane %v855, 0
    %v961 = vperm.slane %v855, 2
    %v962 = vperm.slane %v867, 0
    %v963 = vperm.slane %v867, 2
    %v964 = vsel %vm919, %v891, %v889
    %v965 = vsel %vm921, %v893, %v964
    %v966 = vsel %vm923, %v895, %v965
    %v967 = vsel %vm925, %v897, %v966
    %v968 = vsel %vm927, %v899, %v967
    %v969 = vsel %vm929, %v901, %v968
    %v970 = vsel %vm931, %v960, %v969
    %v971 = vsel %vm919, %v892, %v890
    %v972 = vsel %vm921, %v894, %v971
    %v973 = vsel %vm923, %v896, %v972
    %v974 = vsel %vm925, %v898, %v973
    %v975 = vsel %vm927, %v900, %v974
    %v976 = vsel %vm929, %v902, %v975
    %v977 = vsel %vm931, %v961, %v976
    %v978 = vsel %vm919, %v907, %v905
    %v979 = vsel %vm921, %v909, %v978
    %v980 = vsel %vm923, %v911, %v979
    %v981 = vsel %vm925, %v913, %v980
    %v982 = vsel %vm927, %v915, %v981
    %v983 = vsel %vm929, %v917, %v982
    %v984 = vsel %vm931, %v962, %v983
    %v985 = vsel %vm919, %v908, %v906
    %v986 = vsel %vm921, %v910, %v985
    %v987 = vsel %vm923, %v912, %v986
    %v988 = vsel %vm925, %v914, %v987
    %v989 = vsel %vm927, %v916, %v988
    %v990 = vsel %vm929, %v918, %v989
    %v991 = vsel %vm931, %v963, %v990
    %v998 = vperm.slane %v856, 0
    %v999 = vperm.slane %v856, 2
    %v1000 = vperm.slane %v868, 0
    %v1001 = vperm.slane %v868, 2
    %v1002 = vsel %vm919, %v893, %v891
    %v1003 = vsel %vm921, %v895, %v1002
    %v1004 = vsel %vm923, %v897, %v1003
    %v1005 = vsel %vm925, %v899, %v1004
    %v1006 = vsel %vm927, %v901, %v1005
    %v1007 = vsel %vm929, %v960, %v1006
    %v1008 = vsel %vm931, %v998, %v1007
    %v1009 = vsel %vm919, %v894, %v892
    %v1010 = vsel %vm921, %v896, %v1009
    %v1011 = vsel %vm923, %v898, %v1010
    %v1012 = vsel %vm925, %v900, %v1011
    %v1013 = vsel %vm927, %v902, %v1012
    %v1014 = vsel %vm929, %v961, %v1013
    %v1015 = vsel %vm931, %v999, %v1014
    %v1016 = vsel %vm919, %v909, %v907
    %v1017 = vsel %vm921, %v911, %v1016
    %v1018 = vsel %vm923, %v913, %v1017
    %v1019 = vsel %vm925, %v915, %v1018
    %v1020 = vsel %vm927, %v917, %v1019
    %v1021 = vsel %vm929, %v962, %v1020
    %v1022 = vsel %vm931, %v1000, %v1021
    %v1023 = vsel %vm919, %v910, %v908
    %v1024 = vsel %vm921, %v912, %v1023
    %v1025 = vsel %vm923, %v914, %v1024
    %v1026 = vsel %vm925, %v916, %v1025
    %v1027 = vsel %vm927, %v918, %v1026
    %v1028 = vsel %vm929, %v963, %v1027
    %v1029 = vsel %vm931, %v1001, %v1028
    %v1036 = vperm.slane %v857, 0
    %v1037 = vperm.slane %v857, 2
    %v1038 = vperm.slane %v869, 0
    %v1039 = vperm.slane %v869, 2
    %v1040 = vsel %vm919, %v895, %v893
    %v1041 = vsel %vm921, %v897, %v1040
    %v1042 = vsel %vm923, %v899, %v1041
    %v1043 = vsel %vm925, %v901, %v1042
    %v1044 = vsel %vm927, %v960, %v1043
    %v1045 = vsel %vm929, %v998, %v1044
    %v1046 = vsel %vm931, %v1036, %v1045
    %v1047 = vsel %vm919, %v896, %v894
    %v1048 = vsel %vm921, %v898, %v1047
    %v1049 = vsel %vm923, %v900, %v1048
    %v1050 = vsel %vm925, %v902, %v1049
    %v1051 = vsel %vm927, %v961, %v1050
    %v1052 = vsel %vm929, %v999, %v1051
    %v1053 = vsel %vm931, %v1037, %v1052
    %v1054 = vsel %vm919, %v911, %v909
    %v1055 = vsel %vm921, %v913, %v1054
    %v1056 = vsel %vm923, %v915, %v1055
    %v1057 = vsel %vm925, %v917, %v1056
    %v1058 = vsel %vm927, %v962, %v1057
    %v1059 = vsel %vm929, %v1000, %v1058
    %v1060 = vsel %vm931, %v1038, %v1059
    %v1061 = vsel %vm919, %v912, %v910
    %v1062 = vsel %vm921, %v914, %v1061
    %v1063 = vsel %vm923, %v916, %v1062
    %v1064 = vsel %vm925, %v918, %v1063
    %v1065 = vsel %vm927, %v963, %v1064
    %v1066 = vsel %vm929, %v1001, %v1065
    %v1067 = vsel %vm931, %v1039, %v1066
    %v1074 = vperm.slane %v858, 0
    %v1075 = vperm.slane %v858, 2
    %v1076 = vperm.slane %v870, 0
    %v1077 = vperm.slane %v870, 2
    %v1078 = vsel %vm919, %v897, %v895
    %v1079 = vsel %vm921, %v899, %v1078
    %v1080 = vsel %vm923, %v901, %v1079
    %v1081 = vsel %vm925, %v960, %v1080
    %v1082 = vsel %vm927, %v998, %v1081
    %v1083 = vsel %vm929, %v1036, %v1082
    %v1084 = vsel %vm931, %v1074, %v1083
    %v1085 = vsel %vm919, %v898, %v896
    %v1086 = vsel %vm921, %v900, %v1085
    %v1087 = vsel %vm923, %v902, %v1086
    %v1088 = vsel %vm925, %v961, %v1087
    %v1089 = vsel %vm927, %v999, %v1088
    %v1090 = vsel %vm929, %v1037, %v1089
    %v1091 = vsel %vm931, %v1075, %v1090
    %v1092 = vsel %vm919, %v913, %v911
    %v1093 = vsel %vm921, %v915, %v1092
    %v1094 = vsel %vm923, %v917, %v1093
    %v1095 = vsel %vm925, %v962, %v1094
    %v1096 = vsel %vm927, %v1000, %v1095
    %v1097 = vsel %vm929, %v1038, %v1096
    %v1098 = vsel %vm931, %v1076, %v1097
    %v1099 = vsel %vm919, %v914, %v912
    %v1100 = vsel %vm921, %v916, %v1099
    %v1101 = vsel %vm923, %v918, %v1100
    %v1102 = vsel %vm925, %v963, %v1101
    %v1103 = vsel %vm927, %v1001, %v1102
    %v1104 = vsel %vm929, %v1039, %v1103
    %v1105 = vsel %vm931, %v1077, %v1104
    %v1110 = vpack.c.bf16 %v946, %v932
    %v1111 = vpack.c.bf16 %v953, %v939
    %v1112 = vpack.c.bf16 %v984, %v970
    %v1113 = vpack.c.bf16 %v991, %v977
    %v1114 = vpack.c.bf16 %v1022, %v1008
    %v1115 = vpack.c.bf16 %v1029, %v1015
    %v1116 = vpack.c.bf16 %v1060, %v1046
    %v1117 = vpack.c.bf16 %v1067, %v1053
    %v1118 = vpack.c.bf16 %v1098, %v1084
    %v1119 = vpack.c.bf16 %v1105, %v1091
    %v1120 = vld [vmem:[%s3] sm:$0xff]
    %v1121 = vld [vmem:[%s3 + $0x8] sm:$0xff]
    %v1122 = vld [vmem:[%s3 + $0x10] sm:$0xff]
    %v1123 = vld [vmem:[%s3 + $0x18] sm:$0xff]
    %v1124 = vld [vmem:[%s3 + $0x20] sm:$0xff]
    %v1125 = vld [vmem:[%s3 + $0x28] sm:$0xff]
    %v1126 = vld [vmem:[%s3 + $0x30] sm:$0xff]
    %v1127 = vld [vmem:[%s3 + $0x38] sm:$0xff]
    %v1128 = vld [vmem:[%s3 + $0x40] sm:$0xff]
    %v1129 = vld [vmem:[%s3 + $0x48] sm:$0xff]
    %v1130 = vld [vmem:[%s3 + $0x50] sm:$0xff]
    %v1131 = vld [vmem:[%s3 + $0x58] sm:$0xff]
    %v1132 = vld [vmem:[%s3 + $0x60] sm:$0xff]
    %v1133 = vld [vmem:[%s3 + $0x68] sm:$0xff]
    %v1134 = vld [vmem:[%s3 + $0x70] sm:$0xff]
    %v1135 = vld [vmem:[%s3 + $0x78] sm:$0xff]
    %v1136 = vld [vmem:[%s3 + $0x80] sm:$0xff]
    %v1137 = vld [vmem:[%s3 + $0x88] sm:$0xff]
    %v1138 = vld [vmem:[%s3 + $0x90] sm:$0xff]
    %v1139 = vld [vmem:[%s3 + $0x98] sm:$0xff]
    %v1140 = vld [vmem:[%s3 + $0xa0] sm:$0xff]
    %v1141 = vld [vmem:[%s3 + $0xa8] sm:$0xff]
    %v1142 = vld [vmem:[%s3 + $0xb0] sm:$0xff]
    %v1143 = vld [vmem:[%s3 + $0xb8] sm:$0xff]
    %v1144 = vld [vmem:[%s3 + $0xc0] sm:$0xff]
    %v1145 = vld [vmem:[%s3 + $0xc8] sm:$0xff]
    %v1146 = vld [vmem:[%s3 + $0xd0] sm:$0xff]
    %v1147 = vld [vmem:[%s3 + $0xd8] sm:$0xff]
    %v1148 = vld [vmem:[%s3 + $0xe0] sm:$0xff]
    %v1149 = vld [vmem:[%s3 + $0xe8] sm:$0xff]
    %v1150 = vld [vmem:[%s3 + $0xf0] sm:$0xff]
    %v1151 = vld [vmem:[%s3 + $0xf8] sm:$0xff]
    %v1152 = vld [vmem:[%s3 + $0x100] sm:$0xff]
    %v1153 = vld [vmem:[%s3 + $0x108] sm:$0xff]
    %v1154 = vld [vmem:[%s3 + $0x110] sm:$0xff]
    %v1155 = vld [vmem:[%s3 + $0x118] sm:$0xff]
    %v1156 = vld [vmem:[%s3 + $0x120] sm:$0xff]
    %v1157 = vld [vmem:[%s3 + $0x128] sm:$0xff]
    %v1158 = vld [vmem:[%s3 + $0x130] sm:$0xff]
    %v1159 = vld [vmem:[%s3 + $0x138] sm:$0xff]
    %v1160 = vld [vmem:[%s3 + $0x140] sm:$0xff]
    %v1161 = vld [vmem:[%s3 + $0x148] sm:$0xff]
    %v1162 = vld [vmem:[%s3 + $0x150] sm:$0xff]
    %v1163 = vld [vmem:[%s3 + $0x158] sm:$0xff]
    %v1164 = vld [vmem:[%s3 + $0x160] sm:$0xff]
    %v1165 = vld [vmem:[%s3 + $0x168] sm:$0xff]
    %v1166 = vld [vmem:[%s3 + $0x170] sm:$0xff]
    %v1167 = vld [vmem:[%s3 + $0x178] sm:$0xff]
    %v1168 = vld [vmem:[%s3 + $0x180] sm:$0xff]
    %v1169 = vld [vmem:[%s3 + $0x188] sm:$0xff]
    %v1170 = vld [vmem:[%s3 + $0x190] sm:$0xff]
    %v1171 = vld [vmem:[%s3 + $0x198] sm:$0xff]
    %v1172 = vld [vmem:[%s3 + $0x1a0] sm:$0xff]
    %v1173 = vld [vmem:[%s3 + $0x1a8] sm:$0xff]
    %v1174 = vld [vmem:[%s3 + $0x1b0] sm:$0xff]
    %v1175 = vld [vmem:[%s3 + $0x1b8] sm:$0xff]
    %v1176 = vld [vmem:[%s3 + $0x1c0] sm:$0xff]
    %v1177 = vld [vmem:[%s3 + $0x1c8] sm:$0xff]
    %v1178 = vld [vmem:[%s3 + $0x1d0] sm:$0xff]
    %v1179 = vld [vmem:[%s3 + $0x1d8] sm:$0xff]
    %v1180 = vld [vmem:[%s3 + $0x1e0] sm:$0xff]
    %v1181 = vld [vmem:[%s3 + $0x1e8] sm:$0xff]
    %v1182 = vld [vmem:[%s3 + $0x1f0] sm:$0xff]
    %v1183 = vld [vmem:[%s3 + $0x1f8] sm:$0xff]
    %v1184 = vld [vmem:[%s3 + $0x200] sm:$0xff]
    %v1185 = vld [vmem:[%s3 + $0x208] sm:$0xff]
    %v1186 = vld [vmem:[%s3 + $0x210] sm:$0xff]
    %v1187 = vld [vmem:[%s3 + $0x218] sm:$0xff]
    %v1188 = vld [vmem:[%s3 + $0x220] sm:$0xff]
    %v1189 = vld [vmem:[%s3 + $0x228] sm:$0xff]
    %v1190 = vld [vmem:[%s3 + $0x230] sm:$0xff]
    %v1191 = vld [vmem:[%s3 + $0x238] sm:$0xff]
    %v1192 = vld [vmem:[%s3 + $0x240] sm:$0xff]
    %v1193 = vld [vmem:[%s3 + $0x248] sm:$0xff]
    %v1194 = vld [vmem:[%s3 + $0x250] sm:$0xff]
    %v1195 = vld [vmem:[%s3 + $0x258] sm:$0xff]
    %v1196 = vld [vmem:[%s3 + $0x260] sm:$0xff]
    %v1197 = vld [vmem:[%s3 + $0x268] sm:$0xff]
    %v1198 = vld [vmem:[%s3 + $0x270] sm:$0xff]
    %v1199 = vld [vmem:[%s3 + $0x278] sm:$0xff]
    %v1200 = vld [vmem:[%s3 + $0x280] sm:$0xff]
    %v1201 = vld [vmem:[%s3 + $0x288] sm:$0xff]
    %v1202 = vld [vmem:[%s3 + $0x290] sm:$0xff]
    %v1203 = vld [vmem:[%s3 + $0x298] sm:$0xff]
    %v1204 = vld [vmem:[%s3 + $0x2a0] sm:$0xff]
    %v1205 = vld [vmem:[%s3 + $0x2a8] sm:$0xff]
    %v1206 = vld [vmem:[%s3 + $0x2b0] sm:$0xff]
    %v1207 = vld [vmem:[%s3 + $0x2b8] sm:$0xff]
    %v1208 = vld [vmem:[%s3 + $0x2c0] sm:$0xff]
    %v1209 = vld [vmem:[%s3 + $0x2c8] sm:$0xff]
    %v1210 = vld [vmem:[%s3 + $0x2d0] sm:$0xff]
    %v1211 = vld [vmem:[%s3 + $0x2d8] sm:$0xff]
    %v1212 = vld [vmem:[%s3 + $0x2e0] sm:$0xff]
    %v1213 = vld [vmem:[%s3 + $0x2e8] sm:$0xff]
    %v1214 = vld [vmem:[%s3 + $0x2f0] sm:$0xff]
    %v1215 = vld [vmem:[%s3 + $0x2f8] sm:$0xff]
    %v1216 = vld [vmem:[%s3 + $0x300] sm:$0xff]
    %v1217 = vld [vmem:[%s3 + $0x308] sm:$0xff]
    %v1218 = vld [vmem:[%s3 + $0x310] sm:$0xff]
    %v1219 = vld [vmem:[%s3 + $0x318] sm:$0xff]
    %v1220 = vld [vmem:[%s3 + $0x320] sm:$0xff]
    %v1221 = vld [vmem:[%s3 + $0x328] sm:$0xff]
    %v1222 = vld [vmem:[%s3 + $0x330] sm:$0xff]
    %v1223 = vld [vmem:[%s3 + $0x338] sm:$0xff]
    %v1224 = vld [vmem:[%s3 + $0x340] sm:$0xff]
    %v1225 = vld [vmem:[%s3 + $0x348] sm:$0xff]
    %v1226 = vld [vmem:[%s3 + $0x350] sm:$0xff]
    %v1227 = vld [vmem:[%s3 + $0x358] sm:$0xff]
    %v1228 = vld [vmem:[%s3 + $0x360] sm:$0xff]
    %v1229 = vld [vmem:[%s3 + $0x368] sm:$0xff]
    %v1230 = vld [vmem:[%s3 + $0x370] sm:$0xff]
    %v1231 = vld [vmem:[%s3 + $0x378] sm:$0xff]
    %v1232 = vld [vmem:[%s3 + $0x380] sm:$0xff]
    %v1233 = vld [vmem:[%s3 + $0x388] sm:$0xff]
    %v1234 = vld [vmem:[%s3 + $0x390] sm:$0xff]
    %v1235 = vld [vmem:[%s3 + $0x398] sm:$0xff]
    %v1236 = vld [vmem:[%s3 + $0x3a0] sm:$0xff]
    %v1237 = vld [vmem:[%s3 + $0x3a8] sm:$0xff]
    %v1238 = vld [vmem:[%s3 + $0x3b0] sm:$0xff]
    %v1239 = vld [vmem:[%s3 + $0x3b8] sm:$0xff]
    %v1240 = vld [vmem:[%s3 + $0x3c0] sm:$0xff]
    %v1241 = vld [vmem:[%s3 + $0x3c8] sm:$0xff]
    %v1242 = vld [vmem:[%s3 + $0x3d0] sm:$0xff]
    %v1243 = vld [vmem:[%s3 + $0x3d8] sm:$0xff]
    %v1244 = vld [vmem:[%s3 + $0x3e0] sm:$0xff]
    %v1245 = vld [vmem:[%s3 + $0x3e8] sm:$0xff]
    %v1246 = vld [vmem:[%s3 + $0x3f0] sm:$0xff]
    %v1247 = vld [vmem:[%s3 + $0x3f8] sm:$0xff]
    %v1248 = vld [vmem:[%s3 + $0x400] sm:$0xff]
    %v1249 = vld [vmem:[%s3 + $0x408] sm:$0xff]
    %v1250 = vld [vmem:[%s3 + $0x410] sm:$0xff]
    %v1251 = vld [vmem:[%s3 + $0x418] sm:$0xff]
    %v1252 = vld [vmem:[%s3 + $0x420] sm:$0xff]
    %v1253 = vld [vmem:[%s3 + $0x428] sm:$0xff]
    %v1254 = vld [vmem:[%s3 + $0x430] sm:$0xff]
    %v1255 = vld [vmem:[%s3 + $0x438] sm:$0xff]
    %v1256 = vld [vmem:[%s3 + $0x440] sm:$0xff]
    %v1257 = vld [vmem:[%s3 + $0x448] sm:$0xff]
    %v1258 = vld [vmem:[%s3 + $0x450] sm:$0xff]
    %v1259 = vld [vmem:[%s3 + $0x458] sm:$0xff]
    %v1260 = vld [vmem:[%s3 + $0x460] sm:$0xff]
    %v1261 = vld [vmem:[%s3 + $0x468] sm:$0xff]
    %v1262 = vld [vmem:[%s3 + $0x470] sm:$0xff]
    %v1263 = vld [vmem:[%s3 + $0x478] sm:$0xff]
    %v1264 = vld [vmem:[%s3 + $0x480] sm:$0xff]
    %v1265 = vld [vmem:[%s3 + $0x488] sm:$0xff]
    %v1266 = vld [vmem:[%s3 + $0x490] sm:$0xff]
    %v1267 = vld [vmem:[%s3 + $0x498] sm:$0xff]
    %v1268 = vld [vmem:[%s3 + $0x4a0] sm:$0xff]
    %v1269 = vld [vmem:[%s3 + $0x4a8] sm:$0xff]
    %v1270 = vld [vmem:[%s3 + $0x4b0] sm:$0xff]
    %v1271 = vld [vmem:[%s3 + $0x4b8] sm:$0xff]
    %v1272 = vld [vmem:[%s3 + $0x4c0] sm:$0xff]
    %v1273 = vld [vmem:[%s3 + $0x4c8] sm:$0xff]
    %v1274 = vld [vmem:[%s3 + $0x4d0] sm:$0xff]
    %v1275 = vld [vmem:[%s3 + $0x4d8] sm:$0xff]
    %v1276 = vld [vmem:[%s3 + $0x4e0] sm:$0xff]
    %v1277 = vld [vmem:[%s3 + $0x4e8] sm:$0xff]
    %v1278 = vld [vmem:[%s3 + $0x4f0] sm:$0xff]
    %v1279 = vld [vmem:[%s3 + $0x4f8] sm:$0xff]
    %v1280 = vld [vmem:[%s4] sm:$0x3]
    %v1282 = vperm.slane %v1280, 0
    %v1283 = vperm.slane %v1280, 1
    %v1446 = vunpack.c.l.b16 %v1120
    %v1447 = vunpack.c.h.b16 %v1120
    %v1448 = vunpack.c.l.b16 %v1121
    %v1449 = vunpack.c.h.b16 %v1121
    %v1450 = vunpack.c.l.b16 %v1122
    %v1451 = vunpack.c.h.b16 %v1122
    %v1452 = vunpack.c.l.b16 %v1123
    %v1453 = vunpack.c.h.b16 %v1123
    %v1454 = vunpack.c.l.b16 %v1124
    %v1455 = vunpack.c.h.b16 %v1124
    %v1456 = vunpack.c.l.b16 %v1125
    %v1457 = vunpack.c.h.b16 %v1125
    %v1458 = vunpack.c.l.b16 %v1126
    %v1459 = vunpack.c.h.b16 %v1126
    %v1460 = vunpack.c.l.b16 %v1127
    %v1461 = vunpack.c.h.b16 %v1127
    %v1462 = vunpack.c.l.b16 %v1128
    %v1463 = vunpack.c.h.b16 %v1128
    %v1464 = vunpack.c.l.b16 %v1129
    %v1465 = vunpack.c.h.b16 %v1129
    %v1466 = vunpack.c.l.b16 %v1130
    %v1467 = vunpack.c.h.b16 %v1130
    %v1468 = vunpack.c.l.b16 %v1131
    %v1469 = vunpack.c.h.b16 %v1131
    %v1470 = vunpack.c.l.b16 %v1132
    %v1471 = vunpack.c.h.b16 %v1132
    %v1472 = vunpack.c.l.b16 %v1133
    %v1473 = vunpack.c.h.b16 %v1133
    %v1474 = vunpack.c.l.b16 %v1134
    %v1475 = vunpack.c.h.b16 %v1134
    %v1476 = vunpack.c.l.b16 %v1135
    %v1477 = vunpack.c.h.b16 %v1135
    %v1478 = vunpack.c.l.b16 %v1136
    %v1479 = vunpack.c.h.b16 %v1136
    %v1480 = vunpack.c.l.b16 %v1137
    %v1481 = vunpack.c.h.b16 %v1137
    %v1482 = vunpack.c.l.b16 %v1138
    %v1483 = vunpack.c.h.b16 %v1138
    %v1484 = vunpack.c.l.b16 %v1139
    %v1485 = vunpack.c.h.b16 %v1139
    %v1486 = vunpack.c.l.b16 %v1140
    %v1487 = vunpack.c.h.b16 %v1140
    %v1488 = vunpack.c.l.b16 %v1141
    %v1489 = vunpack.c.h.b16 %v1141
    %v1490 = vunpack.c.l.b16 %v1142
    %v1491 = vunpack.c.h.b16 %v1142
    %v1492 = vunpack.c.l.b16 %v1143
    %v1493 = vunpack.c.h.b16 %v1143
    %v1494 = vunpack.c.l.b16 %v1144
    %v1495 = vunpack.c.h.b16 %v1144
    %v1496 = vunpack.c.l.b16 %v1145
    %v1497 = vunpack.c.h.b16 %v1145
    %v1498 = vunpack.c.l.b16 %v1146
    %v1499 = vunpack.c.h.b16 %v1146
    %v1500 = vunpack.c.l.b16 %v1147
    %v1501 = vunpack.c.h.b16 %v1147
    %v1502 = vunpack.c.l.b16 %v1148
    %v1503 = vunpack.c.h.b16 %v1148
    %v1504 = vunpack.c.l.b16 %v1149
    %v1505 = vunpack.c.h.b16 %v1149
    %v1506 = vunpack.c.l.b16 %v1150
    %v1507 = vunpack.c.h.b16 %v1150
    %v1508 = vunpack.c.l.b16 %v1151
    %v1509 = vunpack.c.h.b16 %v1151
    %v1510 = vunpack.c.l.b16 %v1152
    %v1511 = vunpack.c.h.b16 %v1152
    %v1512 = vunpack.c.l.b16 %v1153
    %v1513 = vunpack.c.h.b16 %v1153
    %v1514 = vunpack.c.l.b16 %v1154
    %v1515 = vunpack.c.h.b16 %v1154
    %v1516 = vunpack.c.l.b16 %v1155
    %v1517 = vunpack.c.h.b16 %v1155
    %v1518 = vunpack.c.l.b16 %v1156
    %v1519 = vunpack.c.h.b16 %v1156
    %v1520 = vunpack.c.l.b16 %v1157
    %v1521 = vunpack.c.h.b16 %v1157
    %v1522 = vunpack.c.l.b16 %v1158
    %v1523 = vunpack.c.h.b16 %v1158
    %v1524 = vunpack.c.l.b16 %v1159
    %v1525 = vunpack.c.h.b16 %v1159
    %v1526 = vunpack.c.l.b16 %v1160
    %v1527 = vunpack.c.h.b16 %v1160
    %v1528 = vunpack.c.l.b16 %v1161
    %v1529 = vunpack.c.h.b16 %v1161
    %v1530 = vunpack.c.l.b16 %v1162
    %v1531 = vunpack.c.h.b16 %v1162
    %v1532 = vunpack.c.l.b16 %v1163
    %v1533 = vunpack.c.h.b16 %v1163
    %v1534 = vunpack.c.l.b16 %v1164
    %v1535 = vunpack.c.h.b16 %v1164
    %v1536 = vunpack.c.l.b16 %v1165
    %v1537 = vunpack.c.h.b16 %v1165
    %v1538 = vunpack.c.l.b16 %v1166
    %v1539 = vunpack.c.h.b16 %v1166
    %v1540 = vunpack.c.l.b16 %v1167
    %v1541 = vunpack.c.h.b16 %v1167
    %v1542 = vunpack.c.l.b16 %v1168
    %v1543 = vunpack.c.h.b16 %v1168
    %v1544 = vunpack.c.l.b16 %v1169
    %v1545 = vunpack.c.h.b16 %v1169
    %v1546 = vunpack.c.l.b16 %v1170
    %v1547 = vunpack.c.h.b16 %v1170
    %v1548 = vunpack.c.l.b16 %v1171
    %v1549 = vunpack.c.h.b16 %v1171
    %v1550 = vunpack.c.l.b16 %v1172
    %v1551 = vunpack.c.h.b16 %v1172
    %v1552 = vunpack.c.l.b16 %v1173
    %v1553 = vunpack.c.h.b16 %v1173
    %v1554 = vunpack.c.l.b16 %v1174
    %v1555 = vunpack.c.h.b16 %v1174
    %v1556 = vunpack.c.l.b16 %v1175
    %v1557 = vunpack.c.h.b16 %v1175
    %v1558 = vunpack.c.l.b16 %v1176
    %v1559 = vunpack.c.h.b16 %v1176
    %v1560 = vunpack.c.l.b16 %v1177
    %v1561 = vunpack.c.h.b16 %v1177
    %v1562 = vunpack.c.l.b16 %v1178
    %v1563 = vunpack.c.h.b16 %v1178
    %v1564 = vunpack.c.l.b16 %v1179
    %v1565 = vunpack.c.h.b16 %v1179
    %v1566 = vunpack.c.l.b16 %v1180
    %v1567 = vunpack.c.h.b16 %v1180
    %v1568 = vunpack.c.l.b16 %v1181
    %v1569 = vunpack.c.h.b16 %v1181
    %v1570 = vunpack.c.l.b16 %v1182
    %v1571 = vunpack.c.h.b16 %v1182
    %v1572 = vunpack.c.l.b16 %v1183
    %v1573 = vunpack.c.h.b16 %v1183
    %v1574 = vunpack.c.l.b16 %v1184
    %v1575 = vunpack.c.h.b16 %v1184
    %v1576 = vunpack.c.l.b16 %v1185
    %v1577 = vunpack.c.h.b16 %v1185
    %v1578 = vunpack.c.l.b16 %v1186
    %v1579 = vunpack.c.h.b16 %v1186
    %v1580 = vunpack.c.l.b16 %v1187
    %v1581 = vunpack.c.h.b16 %v1187
    %v1582 = vunpack.c.l.b16 %v1188
    %v1583 = vunpack.c.h.b16 %v1188
    %v1584 = vunpack.c.l.b16 %v1189
    %v1585 = vunpack.c.h.b16 %v1189
    %v1586 = vunpack.c.l.b16 %v1190
    %v1587 = vunpack.c.h.b16 %v1190
    %v1588 = vunpack.c.l.b16 %v1191
    %v1589 = vunpack.c.h.b16 %v1191
    %v1590 = vunpack.c.l.b16 %v1192
    %v1591 = vunpack.c.h.b16 %v1192
    %v1592 = vunpack.c.l.b16 %v1193
    %v1593 = vunpack.c.h.b16 %v1193
    %v1594 = vunpack.c.l.b16 %v1194
    %v1595 = vunpack.c.h.b16 %v1194
    %v1596 = vunpack.c.l.b16 %v1195
    %v1597 = vunpack.c.h.b16 %v1195
    %v1598 = vunpack.c.l.b16 %v1196
    %v1599 = vunpack.c.h.b16 %v1196
    %v1600 = vunpack.c.l.b16 %v1197
    %v1601 = vunpack.c.h.b16 %v1197
    %v1602 = vunpack.c.l.b16 %v1198
    %v1603 = vunpack.c.h.b16 %v1198
    %v1604 = vunpack.c.l.b16 %v1199
    %v1605 = vunpack.c.h.b16 %v1199
    %v1606 = vunpack.c.l.b16 %v1200
    %v1607 = vunpack.c.h.b16 %v1200
    %v1608 = vunpack.c.l.b16 %v1201
    %v1609 = vunpack.c.h.b16 %v1201
    %v1610 = vunpack.c.l.b16 %v1202
    %v1611 = vunpack.c.h.b16 %v1202
    %v1612 = vunpack.c.l.b16 %v1203
    %v1613 = vunpack.c.h.b16 %v1203
    %v1614 = vunpack.c.l.b16 %v1204
    %v1615 = vunpack.c.h.b16 %v1204
    %v1616 = vunpack.c.l.b16 %v1205
    %v1617 = vunpack.c.h.b16 %v1205
    %v1618 = vunpack.c.l.b16 %v1206
    %v1619 = vunpack.c.h.b16 %v1206
    %v1620 = vunpack.c.l.b16 %v1207
    %v1621 = vunpack.c.h.b16 %v1207
    %v1622 = vunpack.c.l.b16 %v1208
    %v1623 = vunpack.c.h.b16 %v1208
    %v1624 = vunpack.c.l.b16 %v1209
    %v1625 = vunpack.c.h.b16 %v1209
    %v1626 = vunpack.c.l.b16 %v1210
    %v1627 = vunpack.c.h.b16 %v1210
    %v1628 = vunpack.c.l.b16 %v1211
    %v1629 = vunpack.c.h.b16 %v1211
    %v1630 = vunpack.c.l.b16 %v1212
    %v1631 = vunpack.c.h.b16 %v1212
    %v1632 = vunpack.c.l.b16 %v1213
    %v1633 = vunpack.c.h.b16 %v1213
    %v1634 = vunpack.c.l.b16 %v1214
    %v1635 = vunpack.c.h.b16 %v1214
    %v1636 = vunpack.c.l.b16 %v1215
    %v1637 = vunpack.c.h.b16 %v1215
    %v1638 = vunpack.c.l.b16 %v1216
    %v1639 = vunpack.c.h.b16 %v1216
    %v1640 = vunpack.c.l.b16 %v1217
    %v1641 = vunpack.c.h.b16 %v1217
    %v1642 = vunpack.c.l.b16 %v1218
    %v1643 = vunpack.c.h.b16 %v1218
    %v1644 = vunpack.c.l.b16 %v1219
    %v1645 = vunpack.c.h.b16 %v1219
    %v1646 = vunpack.c.l.b16 %v1220
    %v1647 = vunpack.c.h.b16 %v1220
    %v1648 = vunpack.c.l.b16 %v1221
    %v1649 = vunpack.c.h.b16 %v1221
    %v1650 = vunpack.c.l.b16 %v1222
    %v1651 = vunpack.c.h.b16 %v1222
    %v1652 = vunpack.c.l.b16 %v1223
    %v1653 = vunpack.c.h.b16 %v1223
    %v1654 = vunpack.c.l.b16 %v1224
    %v1655 = vunpack.c.h.b16 %v1224
    %v1656 = vunpack.c.l.b16 %v1225
    %v1657 = vunpack.c.h.b16 %v1225
    %v1658 = vunpack.c.l.b16 %v1226
    %v1659 = vunpack.c.h.b16 %v1226
    %v1660 = vunpack.c.l.b16 %v1227
    %v1661 = vunpack.c.h.b16 %v1227
    %v1662 = vunpack.c.l.b16 %v1228
    %v1663 = vunpack.c.h.b16 %v1228
    %v1664 = vunpack.c.l.b16 %v1229
    %v1665 = vunpack.c.h.b16 %v1229
    %v1666 = vunpack.c.l.b16 %v1230
    %v1667 = vunpack.c.h.b16 %v1230
    %v1668 = vunpack.c.l.b16 %v1231
    %v1669 = vunpack.c.h.b16 %v1231
    %v1670 = vunpack.c.l.b16 %v1232
    %v1671 = vunpack.c.h.b16 %v1232
    %v1672 = vunpack.c.l.b16 %v1233
    %v1673 = vunpack.c.h.b16 %v1233
    %v1674 = vunpack.c.l.b16 %v1234
    %v1675 = vunpack.c.h.b16 %v1234
    %v1676 = vunpack.c.l.b16 %v1235
    %v1677 = vunpack.c.h.b16 %v1235
    %v1678 = vunpack.c.l.b16 %v1236
    %v1679 = vunpack.c.h.b16 %v1236
    %v1680 = vunpack.c.l.b16 %v1237
    %v1681 = vunpack.c.h.b16 %v1237
    %v1682 = vunpack.c.l.b16 %v1238
    %v1683 = vunpack.c.h.b16 %v1238
    %v1684 = vunpack.c.l.b16 %v1239
    %v1685 = vunpack.c.h.b16 %v1239
    %v1686 = vunpack.c.l.b16 %v1240
    %v1687 = vunpack.c.h.b16 %v1240
    %v1688 = vunpack.c.l.b16 %v1241
    %v1689 = vunpack.c.h.b16 %v1241
    %v1690 = vunpack.c.l.b16 %v1242
    %v1691 = vunpack.c.h.b16 %v1242
    %v1692 = vunpack.c.l.b16 %v1243
    %v1693 = vunpack.c.h.b16 %v1243
    %v1694 = vunpack.c.l.b16 %v1244
    %v1695 = vunpack.c.h.b16 %v1244
    %v1696 = vunpack.c.l.b16 %v1245
    %v1697 = vunpack.c.h.b16 %v1245
    %v1698 = vunpack.c.l.b16 %v1246
    %v1699 = vunpack.c.h.b16 %v1246
    %v1700 = vunpack.c.l.b16 %v1247
    %v1701 = vunpack.c.h.b16 %v1247
    %v1702 = vunpack.c.l.b16 %v1248
    %v1703 = vunpack.c.h.b16 %v1248
    %v1704 = vunpack.c.l.b16 %v1249
    %v1705 = vunpack.c.h.b16 %v1249
    %v1706 = vunpack.c.l.b16 %v1250
    %v1707 = vunpack.c.h.b16 %v1250
    %v1708 = vunpack.c.l.b16 %v1251
    %v1709 = vunpack.c.h.b16 %v1251
    %v1710 = vunpack.c.l.b16 %v1252
    %v1711 = vunpack.c.h.b16 %v1252
    %v1712 = vunpack.c.l.b16 %v1253
    %v1713 = vunpack.c.h.b16 %v1253
    %v1714 = vunpack.c.l.b16 %v1254
    %v1715 = vunpack.c.h.b16 %v1254
    %v1716 = vunpack.c.l.b16 %v1255
    %v1717 = vunpack.c.h.b16 %v1255
    %v1718 = vunpack.c.l.b16 %v1256
    %v1719 = vunpack.c.h.b16 %v1256
    %v1720 = vunpack.c.l.b16 %v1257
    %v1721 = vunpack.c.h.b16 %v1257
    %v1722 = vunpack.c.l.b16 %v1258
    %v1723 = vunpack.c.h.b16 %v1258
    %v1724 = vunpack.c.l.b16 %v1259
    %v1725 = vunpack.c.h.b16 %v1259
    %v1726 = vunpack.c.l.b16 %v1260
    %v1727 = vunpack.c.h.b16 %v1260
    %v1728 = vunpack.c.l.b16 %v1261
    %v1729 = vunpack.c.h.b16 %v1261
    %v1730 = vunpack.c.l.b16 %v1262
    %v1731 = vunpack.c.h.b16 %v1262
    %v1732 = vunpack.c.l.b16 %v1263
    %v1733 = vunpack.c.h.b16 %v1263
    %v1734 = vunpack.c.l.b16 %v1264
    %v1735 = vunpack.c.h.b16 %v1264
    %v1736 = vunpack.c.l.b16 %v1265
    %v1737 = vunpack.c.h.b16 %v1265
    %v1738 = vunpack.c.l.b16 %v1266
    %v1739 = vunpack.c.h.b16 %v1266
    %v1740 = vunpack.c.l.b16 %v1267
    %v1741 = vunpack.c.h.b16 %v1267
    %v1742 = vunpack.c.l.b16 %v1268
    %v1743 = vunpack.c.h.b16 %v1268
    %v1744 = vunpack.c.l.b16 %v1269
    %v1745 = vunpack.c.h.b16 %v1269
    %v1746 = vunpack.c.l.b16 %v1270
    %v1747 = vunpack.c.h.b16 %v1270
    %v1748 = vunpack.c.l.b16 %v1271
    %v1749 = vunpack.c.h.b16 %v1271
    %v1750 = vunpack.c.l.b16 %v1272
    %v1751 = vunpack.c.h.b16 %v1272
    %v1752 = vunpack.c.l.b16 %v1273
    %v1753 = vunpack.c.h.b16 %v1273
    %v1754 = vunpack.c.l.b16 %v1274
    %v1755 = vunpack.c.h.b16 %v1274
    %v1756 = vunpack.c.l.b16 %v1275
    %v1757 = vunpack.c.h.b16 %v1275
    %v1758 = vunpack.c.l.b16 %v1276
    %v1759 = vunpack.c.h.b16 %v1276
    %v1760 = vunpack.c.l.b16 %v1277
    %v1761 = vunpack.c.h.b16 %v1277
    %v1762 = vunpack.c.l.b16 %v1278
    %v1763 = vunpack.c.h.b16 %v1278
    %v1764 = vunpack.c.l.b16 %v1279
    %v1765 = vunpack.c.h.b16 %v1279
    %v1766 = vpack.c.b16 %v1448, %v1446
    %v1767 = vpack.c.b16 %v1449, %v1447
    %v1768 = vpack.c.b16 %v1452, %v1450
    %v1769 = vpack.c.b16 %v1453, %v1451
    %v1770 = vpack.c.b16 %v1456, %v1454
    %v1771 = vpack.c.b16 %v1457, %v1455
    %v1772 = vpack.c.b16 %v1460, %v1458
    %v1773 = vpack.c.b16 %v1461, %v1459
    %v1774 = vpack.c.b16 %v1464, %v1462
    %v1775 = vpack.c.b16 %v1465, %v1463
    %v1776 = vpack.c.b16 %v1468, %v1466
    %v1777 = vpack.c.b16 %v1469, %v1467
    %v1778 = vpack.c.b16 %v1472, %v1470
    %v1779 = vpack.c.b16 %v1473, %v1471
    %v1780 = vpack.c.b16 %v1476, %v1474
    %v1781 = vpack.c.b16 %v1477, %v1475
    %v1782 = vpack.c.b16 %v1480, %v1478
    %v1783 = vpack.c.b16 %v1481, %v1479
    %v1784 = vpack.c.b16 %v1484, %v1482
    %v1785 = vpack.c.b16 %v1485, %v1483
    %v1786 = vpack.c.b16 %v1488, %v1486
    %v1787 = vpack.c.b16 %v1489, %v1487
    %v1788 = vpack.c.b16 %v1492, %v1490
    %v1789 = vpack.c.b16 %v1493, %v1491
    %v1790 = vpack.c.b16 %v1496, %v1494
    %v1791 = vpack.c.b16 %v1497, %v1495
    %v1792 = vpack.c.b16 %v1500, %v1498
    %v1793 = vpack.c.b16 %v1501, %v1499
    %v1794 = vpack.c.b16 %v1504, %v1502
    %v1795 = vpack.c.b16 %v1505, %v1503
    %v1796 = vpack.c.b16 %v1508, %v1506
    %v1797 = vpack.c.b16 %v1509, %v1507
    %v1798 = vpack.c.b16 %v1512, %v1510
    %v1799 = vpack.c.b16 %v1513, %v1511
    %v1800 = vpack.c.b16 %v1516, %v1514
    %v1801 = vpack.c.b16 %v1517, %v1515
    %v1802 = vpack.c.b16 %v1520, %v1518
    %v1803 = vpack.c.b16 %v1521, %v1519
    %v1804 = vpack.c.b16 %v1524, %v1522
    %v1805 = vpack.c.b16 %v1525, %v1523
    %v1806 = vpack.c.b16 %v1528, %v1526
    %v1807 = vpack.c.b16 %v1529, %v1527
    %v1808 = vpack.c.b16 %v1532, %v1530
    %v1809 = vpack.c.b16 %v1533, %v1531
    %v1810 = vpack.c.b16 %v1536, %v1534
    %v1811 = vpack.c.b16 %v1537, %v1535
    %v1812 = vpack.c.b16 %v1540, %v1538
    %v1813 = vpack.c.b16 %v1541, %v1539
    %v1814 = vpack.c.b16 %v1544, %v1542
    %v1815 = vpack.c.b16 %v1545, %v1543
    %v1816 = vpack.c.b16 %v1548, %v1546
    %v1817 = vpack.c.b16 %v1549, %v1547
    %v1818 = vpack.c.b16 %v1552, %v1550
    %v1819 = vpack.c.b16 %v1553, %v1551
    %v1820 = vpack.c.b16 %v1556, %v1554
    %v1821 = vpack.c.b16 %v1557, %v1555
    %v1822 = vpack.c.b16 %v1560, %v1558
    %v1823 = vpack.c.b16 %v1561, %v1559
    %v1824 = vpack.c.b16 %v1564, %v1562
    %v1825 = vpack.c.b16 %v1565, %v1563
    %v1826 = vpack.c.b16 %v1568, %v1566
    %v1827 = vpack.c.b16 %v1569, %v1567
    %v1828 = vpack.c.b16 %v1572, %v1570
    %v1829 = vpack.c.b16 %v1573, %v1571
    %v1830 = vpack.c.b16 %v1576, %v1574
    %v1831 = vpack.c.b16 %v1577, %v1575
    %v1832 = vpack.c.b16 %v1580, %v1578
    %v1833 = vpack.c.b16 %v1581, %v1579
    %v1834 = vpack.c.b16 %v1584, %v1582
    %v1835 = vpack.c.b16 %v1585, %v1583
    %v1836 = vpack.c.b16 %v1588, %v1586
    %v1837 = vpack.c.b16 %v1589, %v1587
    %v1838 = vpack.c.b16 %v1592, %v1590
    %v1839 = vpack.c.b16 %v1593, %v1591
    %v1840 = vpack.c.b16 %v1596, %v1594
    %v1841 = vpack.c.b16 %v1597, %v1595
    %v1842 = vpack.c.b16 %v1600, %v1598
    %v1843 = vpack.c.b16 %v1601, %v1599
    %v1844 = vpack.c.b16 %v1604, %v1602
    %v1845 = vpack.c.b16 %v1605, %v1603
    %v1846 = vpack.c.b16 %v1608, %v1606
    %v1847 = vpack.c.b16 %v1609, %v1607
    %v1848 = vpack.c.b16 %v1612, %v1610
    %v1849 = vpack.c.b16 %v1613, %v1611
    %v1850 = vpack.c.b16 %v1616, %v1614
    %v1851 = vpack.c.b16 %v1617, %v1615
    %v1852 = vpack.c.b16 %v1620, %v1618
    %v1853 = vpack.c.b16 %v1621, %v1619
    %v1854 = vpack.c.b16 %v1624, %v1622
    %v1855 = vpack.c.b16 %v1625, %v1623
    %v1856 = vpack.c.b16 %v1628, %v1626
    %v1857 = vpack.c.b16 %v1629, %v1627
    %v1858 = vpack.c.b16 %v1632, %v1630
    %v1859 = vpack.c.b16 %v1633, %v1631
    %v1860 = vpack.c.b16 %v1636, %v1634
    %v1861 = vpack.c.b16 %v1637, %v1635
    %v1862 = vpack.c.b16 %v1640, %v1638
    %v1863 = vpack.c.b16 %v1641, %v1639
    %v1864 = vpack.c.b16 %v1644, %v1642
    %v1865 = vpack.c.b16 %v1645, %v1643
    %v1866 = vpack.c.b16 %v1648, %v1646
    %v1867 = vpack.c.b16 %v1649, %v1647
    %v1868 = vpack.c.b16 %v1652, %v1650
    %v1869 = vpack.c.b16 %v1653, %v1651
    %v1870 = vpack.c.b16 %v1656, %v1654
    %v1871 = vpack.c.b16 %v1657, %v1655
    %v1872 = vpack.c.b16 %v1660, %v1658
    %v1873 = vpack.c.b16 %v1661, %v1659
    %v1874 = vpack.c.b16 %v1664, %v1662
    %v1875 = vpack.c.b16 %v1665, %v1663
    %v1876 = vpack.c.b16 %v1668, %v1666
    %v1877 = vpack.c.b16 %v1669, %v1667
    %v1878 = vpack.c.b16 %v1672, %v1670
    %v1879 = vpack.c.b16 %v1673, %v1671
    %v1880 = vpack.c.b16 %v1676, %v1674
    %v1881 = vpack.c.b16 %v1677, %v1675
    %v1882 = vpack.c.b16 %v1680, %v1678
    %v1883 = vpack.c.b16 %v1681, %v1679
    %v1884 = vpack.c.b16 %v1684, %v1682
    %v1885 = vpack.c.b16 %v1685, %v1683
    %v1886 = vpack.c.b16 %v1688, %v1686
    %v1887 = vpack.c.b16 %v1689, %v1687
    %v1888 = vpack.c.b16 %v1692, %v1690
    %v1889 = vpack.c.b16 %v1693, %v1691
    %v1890 = vpack.c.b16 %v1696, %v1694
    %v1891 = vpack.c.b16 %v1697, %v1695
    %v1892 = vpack.c.b16 %v1700, %v1698
    %v1893 = vpack.c.b16 %v1701, %v1699
    %v1894 = vpack.c.b16 %v1704, %v1702
    %v1895 = vpack.c.b16 %v1705, %v1703
    %v1896 = vpack.c.b16 %v1708, %v1706
    %v1897 = vpack.c.b16 %v1709, %v1707
    %v1898 = vpack.c.b16 %v1712, %v1710
    %v1899 = vpack.c.b16 %v1713, %v1711
    %v1900 = vpack.c.b16 %v1716, %v1714
    %v1901 = vpack.c.b16 %v1717, %v1715
    %v1902 = vpack.c.b16 %v1720, %v1718
    %v1903 = vpack.c.b16 %v1721, %v1719
    %v1904 = vpack.c.b16 %v1724, %v1722
    %v1905 = vpack.c.b16 %v1725, %v1723
    %v1906 = vpack.c.b16 %v1728, %v1726
    %v1907 = vpack.c.b16 %v1729, %v1727
    %v1908 = vpack.c.b16 %v1732, %v1730
    %v1909 = vpack.c.b16 %v1733, %v1731
    %v1910 = vpack.c.b16 %v1736, %v1734
    %v1911 = vpack.c.b16 %v1737, %v1735
    %v1912 = vpack.c.b16 %v1740, %v1738
    %v1913 = vpack.c.b16 %v1741, %v1739
    %v1914 = vpack.c.b16 %v1744, %v1742
    %v1915 = vpack.c.b16 %v1745, %v1743
    %v1916 = vpack.c.b16 %v1748, %v1746
    %v1917 = vpack.c.b16 %v1749, %v1747
    %v1918 = vpack.c.b16 %v1752, %v1750
    %v1919 = vpack.c.b16 %v1753, %v1751
    %v1920 = vpack.c.b16 %v1756, %v1754
    %v1921 = vpack.c.b16 %v1757, %v1755
    %v1922 = vpack.c.b16 %v1760, %v1758
    %v1923 = vpack.c.b16 %v1761, %v1759
    %v1924 = vpack.c.b16 %v1764, %v1762
    %v1925 = vpack.c.b16 %v1765, %v1763
    %2086 = vmatpush.bf16.msra.mxu0 %v1780
    %2087 = vmatpush.bf16.msra.mxu0 %v1778
    %2088 = vmatpush.bf16.msra.mxu0 %v1776
    %2089 = vmatpush.bf16.msra.mxu0 %v1774
    %2090 = vmatpush.bf16.msra.mxu0 %v1772
    %2091 = vmatpush.bf16.msra.mxu0 %v1770
    %2092 = vmatpush.bf16.msra.mxu0 %v1768
    %2093 = vmatpush.bf16.msra.mxu0 %v1766
    %2094 = vmatmul.bf16.gmra.mxu0 %v1110
    %v2095 = vpop.f32.mrf.mxu0
    %v2096 = vadd.f32 %v1282, %v2095
    %v2097 = vpop.f32.mrf.mxu0
    %v2098 = vadd.f32 %v1282, %v2097
    %2099 = vdwg.mxu0
    %2100 = vmatpush.bf16.msra.mxu0 %v1796
    %2101 = vmatpush.bf16.msra.mxu0 %v1794
    %2102 = vmatpush.bf16.msra.mxu0 %v1792
    %2103 = vmatpush.bf16.msra.mxu0 %v1790
    %2104 = vmatpush.bf16.msra.mxu0 %v1788
    %2105 = vmatpush.bf16.msra.mxu0 %v1786
    %2106 = vmatpush.bf16.msra.mxu0 %v1784
    %2107 = vmatpush.bf16.msra.mxu0 %v1782
    %2108 = vmatmul.bf16.gmra.mxu0 %v1111
    %v2109 = vpop.f32.mrf.mxu0
    %v2110 = vadd.f32 %v2096, %v2109
    %v2111 = vpop.f32.mrf.mxu0
    %v2112 = vadd.f32 %v2098, %v2111
    %2113 = vdwg.mxu0
    %2114 = vmatpush.bf16.msra.mxu0 %v1812
    %2115 = vmatpush.bf16.msra.mxu0 %v1810
    %2116 = vmatpush.bf16.msra.mxu0 %v1808
    %2117 = vmatpush.bf16.msra.mxu0 %v1806
    %2118 = vmatpush.bf16.msra.mxu0 %v1804
    %2119 = vmatpush.bf16.msra.mxu0 %v1802
    %2120 = vmatpush.bf16.msra.mxu0 %v1800
    %2121 = vmatpush.bf16.msra.mxu0 %v1798
    %2122 = vmatmul.bf16.gmra.mxu0 %v1112
    %v2123 = vpop.f32.mrf.mxu0
    %v2124 = vadd.f32 %v2110, %v2123
    %v2125 = vpop.f32.mrf.mxu0
    %v2126 = vadd.f32 %v2112, %v2125
    %2127 = vdwg.mxu0
    %2128 = vmatpush.bf16.msra.mxu0 %v1828
    %2129 = vmatpush.bf16.msra.mxu0 %v1826
    %2130 = vmatpush.bf16.msra.mxu0 %v1824
    %2131 = vmatpush.bf16.msra.mxu0 %v1822
    %2132 = vmatpush.bf16.msra.mxu0 %v1820
    %2133 = vmatpush.bf16.msra.mxu0 %v1818
    %2134 = vmatpush.bf16.msra.mxu0 %v1816
    %2135 = vmatpush.bf16.msra.mxu0 %v1814
    %2136 = vmatmul.bf16.gmra.mxu0 %v1113
    %v2137 = vpop.f32.mrf.mxu0
    %v2138 = vadd.f32 %v2124, %v2137
    %v2139 = vpop.f32.mrf.mxu0
    %v2140 = vadd.f32 %v2126, %v2139
    %2141 = vdwg.mxu0
    %2142 = vmatpush.bf16.msra.mxu0 %v1844
    %2143 = vmatpush.bf16.msra.mxu0 %v1842
    %2144 = vmatpush.bf16.msra.mxu0 %v1840
    %2145 = vmatpush.bf16.msra.mxu0 %v1838
    %2146 = vmatpush.bf16.msra.mxu0 %v1836
    %2147 = vmatpush.bf16.msra.mxu0 %v1834
    %2148 = vmatpush.bf16.msra.mxu0 %v1832
    %2149 = vmatpush.bf16.msra.mxu0 %v1830
    %2150 = vmatmul.bf16.gmra.mxu0 %v1114
    %v2151 = vpop.f32.mrf.mxu0
    %v2152 = vadd.f32 %v2138, %v2151
    %v2153 = vpop.f32.mrf.mxu0
    %v2154 = vadd.f32 %v2140, %v2153
    %2155 = vdwg.mxu0
    %2156 = vmatpush.bf16.msra.mxu0 %v1860
    %2157 = vmatpush.bf16.msra.mxu0 %v1858
    %2158 = vmatpush.bf16.msra.mxu0 %v1856
    %2159 = vmatpush.bf16.msra.mxu0 %v1854
    %2160 = vmatpush.bf16.msra.mxu0 %v1852
    %2161 = vmatpush.bf16.msra.mxu0 %v1850
    %2162 = vmatpush.bf16.msra.mxu0 %v1848
    %2163 = vmatpush.bf16.msra.mxu0 %v1846
    %2164 = vmatmul.bf16.gmra.mxu0 %v1115
    %v2165 = vpop.f32.mrf.mxu0
    %v2166 = vadd.f32 %v2152, %v2165
    %v2167 = vpop.f32.mrf.mxu0
    %v2168 = vadd.f32 %v2154, %v2167
    %2169 = vdwg.mxu0
    %2170 = vmatpush.bf16.msra.mxu0 %v1876
    %2171 = vmatpush.bf16.msra.mxu0 %v1874
    %2172 = vmatpush.bf16.msra.mxu0 %v1872
    %2173 = vmatpush.bf16.msra.mxu0 %v1870
    %2174 = vmatpush.bf16.msra.mxu0 %v1868
    %2175 = vmatpush.bf16.msra.mxu0 %v1866
    %2176 = vmatpush.bf16.msra.mxu0 %v1864
    %2177 = vmatpush.bf16.msra.mxu0 %v1862
    %2178 = vmatmul.bf16.gmra.mxu0 %v1116
    %v2179 = vpop.f32.mrf.mxu0
    %v2180 = vadd.f32 %v2166, %v2179
    %v2181 = vpop.f32.mrf.mxu0
    %v2182 = vadd.f32 %v2168, %v2181
    %2183 = vdwg.mxu0
    %2184 = vmatpush.bf16.msra.mxu0 %v1892
    %2185 = vmatpush.bf16.msra.mxu0 %v1890
    %2186 = vmatpush.bf16.msra.mxu0 %v1888
    %2187 = vmatpush.bf16.msra.mxu0 %v1886
    %2188 = vmatpush.bf16.msra.mxu0 %v1884
    %2189 = vmatpush.bf16.msra.mxu0 %v1882
    %2190 = vmatpush.bf16.msra.mxu0 %v1880
    %2191 = vmatpush.bf16.msra.mxu0 %v1878
    %2192 = vmatmul.bf16.gmra.mxu0 %v1117
    %v2193 = vpop.f32.mrf.mxu0
    %v2194 = vadd.f32 %v2180, %v2193
    %v2195 = vpop.f32.mrf.mxu0
    %v2196 = vadd.f32 %v2182, %v2195
    %2197 = vdwg.mxu0
    %2198 = vmatpush.bf16.msra.mxu0 %v1908
    %2199 = vmatpush.bf16.msra.mxu0 %v1906
    %2200 = vmatpush.bf16.msra.mxu0 %v1904
    %2201 = vmatpush.bf16.msra.mxu0 %v1902
    %2202 = vmatpush.bf16.msra.mxu0 %v1900
    %2203 = vmatpush.bf16.msra.mxu0 %v1898
    %2204 = vmatpush.bf16.msra.mxu0 %v1896
    %2205 = vmatpush.bf16.msra.mxu0 %v1894
    %2206 = vmatmul.bf16.gmra.mxu0 %v1118
    %v2207 = vpop.f32.mrf.mxu0
    %v2208 = vadd.f32 %v2194, %v2207
    %v2209 = vpop.f32.mrf.mxu0
    %v2210 = vadd.f32 %v2196, %v2209
    %2211 = vdwg.mxu0
    %2212 = vmatpush.bf16.msra.mxu0 %v1924
    %2213 = vmatpush.bf16.msra.mxu0 %v1922
    %2214 = vmatpush.bf16.msra.mxu0 %v1920
    %2215 = vmatpush.bf16.msra.mxu0 %v1918
    %2216 = vmatpush.bf16.msra.mxu0 %v1916
    %2217 = vmatpush.bf16.msra.mxu0 %v1914
    %2218 = vmatpush.bf16.msra.mxu0 %v1912
    %2219 = vmatpush.bf16.msra.mxu0 %v1910
    %2220 = vmatmul.bf16.gmra.mxu0 %v1119
    %v2221 = vpop.f32.mrf.mxu0
    %v2222 = vadd.f32 %v2208, %v2221
    %v2223 = vpop.f32.mrf.mxu0
    %v2224 = vadd.f32 %v2210, %v2223
    %2225 = vdwg.mxu0
    %2226 = vmatpush.bf16.msra.mxu0 %v1781
    %2227 = vmatpush.bf16.msra.mxu0 %v1779
    %2228 = vmatpush.bf16.msra.mxu0 %v1777
    %2229 = vmatpush.bf16.msra.mxu0 %v1775
    %2230 = vmatpush.bf16.msra.mxu0 %v1773
    %2231 = vmatpush.bf16.msra.mxu0 %v1771
    %2232 = vmatpush.bf16.msra.mxu0 %v1769
    %2233 = vmatpush.bf16.msra.mxu0 %v1767
    %2234 = vmatmul.bf16.gmra.mxu0 %v1110
    %v2235 = vpop.f32.mrf.mxu0
    %v2236 = vadd.f32 %v1283, %v2235
    %v2237 = vpop.f32.mrf.mxu0
    %v2238 = vadd.f32 %v1283, %v2237
    %2239 = vdwg.mxu0
    %2240 = vmatpush.bf16.msra.mxu0 %v1797
    %2241 = vmatpush.bf16.msra.mxu0 %v1795
    %2242 = vmatpush.bf16.msra.mxu0 %v1793
    %2243 = vmatpush.bf16.msra.mxu0 %v1791
    %2244 = vmatpush.bf16.msra.mxu0 %v1789
    %2245 = vmatpush.bf16.msra.mxu0 %v1787
    %2246 = vmatpush.bf16.msra.mxu0 %v1785
    %2247 = vmatpush.bf16.msra.mxu0 %v1783
    %2248 = vmatmul.bf16.gmra.mxu0 %v1111
    %v2249 = vpop.f32.mrf.mxu0
    %v2250 = vadd.f32 %v2236, %v2249
    %v2251 = vpop.f32.mrf.mxu0
    %v2252 = vadd.f32 %v2238, %v2251
    %2253 = vdwg.mxu0
    %2254 = vmatpush.bf16.msra.mxu0 %v1813
    %2255 = vmatpush.bf16.msra.mxu0 %v1811
    %2256 = vmatpush.bf16.msra.mxu0 %v1809
    %2257 = vmatpush.bf16.msra.mxu0 %v1807
    %2258 = vmatpush.bf16.msra.mxu0 %v1805
    %2259 = vmatpush.bf16.msra.mxu0 %v1803
    %2260 = vmatpush.bf16.msra.mxu0 %v1801
    %2261 = vmatpush.bf16.msra.mxu0 %v1799
    %2262 = vmatmul.bf16.gmra.mxu0 %v1112
    %v2263 = vpop.f32.mrf.mxu0
    %v2264 = vadd.f32 %v2250, %v2263
    %v2265 = vpop.f32.mrf.mxu0
    %v2266 = vadd.f32 %v2252, %v2265
    %2267 = vdwg.mxu0
    %2268 = vmatpush.bf16.msra.mxu0 %v1829
    %2269 = vmatpush.bf16.msra.mxu0 %v1827
    %2270 = vmatpush.bf16.msra.mxu0 %v1825
    %2271 = vmatpush.bf16.msra.mxu0 %v1823
    %2272 = vmatpush.bf16.msra.mxu0 %v1821
    %2273 = vmatpush.bf16.msra.mxu0 %v1819
    %2274 = vmatpush.bf16.msra.mxu0 %v1817
    %2275 = vmatpush.bf16.msra.mxu0 %v1815
    %2276 = vmatmul.bf16.gmra.mxu0 %v1113
    %v2277 = vpop.f32.mrf.mxu0
    %v2278 = vadd.f32 %v2264, %v2277
    %v2279 = vpop.f32.mrf.mxu0
    %v2280 = vadd.f32 %v2266, %v2279
    %2281 = vdwg.mxu0
    %2282 = vmatpush.bf16.msra.mxu0 %v1845
    %2283 = vmatpush.bf16.msra.mxu0 %v1843
    %2284 = vmatpush.bf16.msra.mxu0 %v1841
    %2285 = vmatpush.bf16.msra.mxu0 %v1839
    %2286 = vmatpush.bf16.msra.mxu0 %v1837
    %2287 = vmatpush.bf16.msra.mxu0 %v1835
    %2288 = vmatpush.bf16.msra.mxu0 %v1833
    %2289 = vmatpush.bf16.msra.mxu0 %v1831
    %2290 = vmatmul.bf16.gmra.mxu0 %v1114
    %v2291 = vpop.f32.mrf.mxu0
    %v2292 = vadd.f32 %v2278, %v2291
    %v2293 = vpop.f32.mrf.mxu0
    %v2294 = vadd.f32 %v2280, %v2293
    %2295 = vdwg.mxu0
    %2296 = vmatpush.bf16.msra.mxu0 %v1861
    %2297 = vmatpush.bf16.msra.mxu0 %v1859
    %2298 = vmatpush.bf16.msra.mxu0 %v1857
    %2299 = vmatpush.bf16.msra.mxu0 %v1855
    %2300 = vmatpush.bf16.msra.mxu0 %v1853
    %2301 = vmatpush.bf16.msra.mxu0 %v1851
    %2302 = vmatpush.bf16.msra.mxu0 %v1849
    %2303 = vmatpush.bf16.msra.mxu0 %v1847
    %2304 = vmatmul.bf16.gmra.mxu0 %v1115
    %v2305 = vpop.f32.mrf.mxu0
    %v2306 = vadd.f32 %v2292, %v2305
    %v2307 = vpop.f32.mrf.mxu0
    %v2308 = vadd.f32 %v2294, %v2307
    %2309 = vdwg.mxu0
    %2310 = vmatpush.bf16.msra.mxu0 %v1877
    %2311 = vmatpush.bf16.msra.mxu0 %v1875
    %2312 = vmatpush.bf16.msra.mxu0 %v1873
    %2313 = vmatpush.bf16.msra.mxu0 %v1871
    %2314 = vmatpush.bf16.msra.mxu0 %v1869
    %2315 = vmatpush.bf16.msra.mxu0 %v1867
    %2316 = vmatpush.bf16.msra.mxu0 %v1865
    %2317 = vmatpush.bf16.msra.mxu0 %v1863
    %2318 = vmatmul.bf16.gmra.mxu0 %v1116
    %v2319 = vpop.f32.mrf.mxu0
    %v2320 = vadd.f32 %v2306, %v2319
    %v2321 = vpop.f32.mrf.mxu0
    %v2322 = vadd.f32 %v2308, %v2321
    %2323 = vdwg.mxu0
    %2324 = vmatpush.bf16.msra.mxu0 %v1893
    %2325 = vmatpush.bf16.msra.mxu0 %v1891
    %2326 = vmatpush.bf16.msra.mxu0 %v1889
    %2327 = vmatpush.bf16.msra.mxu0 %v1887
    %2328 = vmatpush.bf16.msra.mxu0 %v1885
    %2329 = vmatpush.bf16.msra.mxu0 %v1883
    %2330 = vmatpush.bf16.msra.mxu0 %v1881
    %2331 = vmatpush.bf16.msra.mxu0 %v1879
    %2332 = vmatmul.bf16.gmra.mxu0 %v1117
    %v2333 = vpop.f32.mrf.mxu0
    %v2334 = vadd.f32 %v2320, %v2333
    %v2335 = vpop.f32.mrf.mxu0
    %v2336 = vadd.f32 %v2322, %v2335
    %2337 = vdwg.mxu0
    %2338 = vmatpush.bf16.msra.mxu0 %v1909
    %2339 = vmatpush.bf16.msra.mxu0 %v1907
    %2340 = vmatpush.bf16.msra.mxu0 %v1905
    %2341 = vmatpush.bf16.msra.mxu0 %v1903
    %2342 = vmatpush.bf16.msra.mxu0 %v1901
    %2343 = vmatpush.bf16.msra.mxu0 %v1899
    %2344 = vmatpush.bf16.msra.mxu0 %v1897
    %2345 = vmatpush.bf16.msra.mxu0 %v1895
    %2346 = vmatmul.bf16.gmra.mxu0 %v1118
    %v2347 = vpop.f32.mrf.mxu0
    %v2348 = vadd.f32 %v2334, %v2347
    %v2349 = vpop.f32.mrf.mxu0
    %v2350 = vadd.f32 %v2336, %v2349
    %2351 = vdwg.mxu0
    %2352 = vmatpush.bf16.msra.mxu0 %v1925
    %2353 = vmatpush.bf16.msra.mxu0 %v1923
    %2354 = vmatpush.bf16.msra.mxu0 %v1921
    %2355 = vmatpush.bf16.msra.mxu0 %v1919
    %2356 = vmatpush.bf16.msra.mxu0 %v1917
    %2357 = vmatpush.bf16.msra.mxu0 %v1915
    %2358 = vmatpush.bf16.msra.mxu0 %v1913
    %2359 = vmatpush.bf16.msra.mxu0 %v1911
    %2360 = vmatmul.bf16.gmra.mxu0 %v1119
    %v2361 = vpop.f32.mrf.mxu0
    %v2362 = vadd.f32 %v2348, %v2361
    %v2363 = vpop.f32.mrf.mxu0
    %v2364 = vadd.f32 %v2350, %v2363
    %2365 = vdwg.mxu0
    %v2366 = vmax.f32 %v2222, %v2362
    %v2367 = vmax.f32 %v2224, %v2364
    %v2370 = vrot.slane %v2366, 2
    %v2371 = vrot.slane %v2366, 4
    %v2372 = vrot.slane %v2366, 6
    %v2373 = vrot.slane %v2367, 2
    %v2374 = vrot.slane %v2367, 4
    %v2375 = vrot.slane %v2367, 6
    %v2382 = vrot.slane %v2366, 7
    %v2383 = vrot.slane %v2382, 2
    %v2384 = vrot.slane %v2370, 7
    %v2385 = vrot.slane %v2384, 2
    %v2386 = vrot.slane %v2371, 7
    %v2387 = vrot.slane %v2386, 2
    %v2388 = vrot.slane %v2372, 7
    %v2389 = vrot.slane %v2388, 2
    %v2390 = vrot.slane %v2367, 7
    %v2391 = vrot.slane %v2390, 2
    %v2392 = vrot.slane %v2373, 7
    %v2393 = vrot.slane %v2392, 2
    %v2394 = vrot.slane %v2374, 7
    %v2395 = vrot.slane %v2394, 2
    %v2396 = vrot.slane %v2375, 7
    %v2397 = vrot.slane %v2396, 2
    %v2406 = vmax.f32 %v2366, %v2383
    %v2407 = vmax.f32 %v2370, %v2385
    %v2408 = vmax.f32 %v2371, %v2387
    %v2409 = vmax.f32 %v2372, %v2389
    %v2410 = vmax.f32 %v2367, %v2391
    %v2411 = vmax.f32 %v2373, %v2393
    %v2412 = vmax.f32 %v2374, %v2395
    %v2413 = vmax.f32 %v2375, %v2397
    %v2414 = vmax.f32 %v2406, 0.0
    %v2415 = vmax.f32 %v2407, 0.0
    %v2416 = vmax.f32 %v2408, 0.0
    %v2417 = vmax.f32 %v2409, 0.0
    %v2418 = vmax.f32 %v2410, 0.0
    %v2419 = vmax.f32 %v2411, 0.0
    %v2420 = vmax.f32 %v2412, 0.0
    %v2421 = vmax.f32 %v2413, 0.0
    %v2430 = vsel %vm925, %v2414, %v2414
    %v2431 = vsel %vm929, %v2414, %v2430
    %v2432 = vrot.slane %v2415, 7
    %v2433 = vsel %vm919, %v2432, %v2431
    %v2434 = vsel %vm923, %v2432, %v2433
    %v2435 = vsel %vm927, %v2432, %v2434
    %v2436 = vsel %vm931, %v2432, %v2435
    %v2437 = vsel %vm925, %v2416, %v2416
    %v2438 = vsel %vm929, %v2416, %v2437
    %v2439 = vrot.slane %v2417, 7
    %v2440 = vsel %vm919, %v2439, %v2438
    %v2441 = vsel %vm923, %v2439, %v2440
    %v2442 = vsel %vm927, %v2439, %v2441
    %v2443 = vsel %vm931, %v2439, %v2442
    %v2444 = vsel %vm925, %v2418, %v2418
    %v2445 = vsel %vm929, %v2418, %v2444
    %v2446 = vrot.slane %v2419, 7
    %v2447 = vsel %vm919, %v2446, %v2445
    %v2448 = vsel %vm923, %v2446, %v2447
    %v2449 = vsel %vm927, %v2446, %v2448
    %v2450 = vsel %vm931, %v2446, %v2449
    %v2451 = vsel %vm925, %v2420, %v2420
    %v2452 = vsel %vm929, %v2420, %v2451
    %v2453 = vrot.slane %v2421, 7
    %v2454 = vsel %vm919, %v2453, %v2452
    %v2455 = vsel %vm923, %v2453, %v2454
    %v2456 = vsel %vm927, %v2453, %v2455
    %v2457 = vsel %vm931, %v2453, %v2456
    %v2462 = vrot.slane %v2450, 4
    %vm2463 = vcmask 1047556
    %v2464 = vsel %vm2463, %v2462, %v2436
    %v2466 = vunpack.c.l.s4 1934713408
    %v2467 = vunpack.c.0.s8 %v2466
    %v2468 = vperm.slane %v2464, %v2467
    %v2469 = vrot.slane %v2468, 4
    %v2470 = vsel %vm2463, 0.0, %v2469
    %v2471 = vrot.slane %v2457, 4
    %v2472 = vsel %vm2463, %v2471, %v2443
    %v2474 = vunpack.c.l.s4 1934713408
    %v2475 = vunpack.c.0.s8 %v2474
    %v2476 = vperm.slane %v2472, %v2475
    %v2477 = vrot.slane %v2476, 4
    %v2478 = vsel %vm2463, 0.0, %v2477
    %v2479 = vpack.c.bf16 %v2468, %v2468
    %v2480 = vpack.c.bf16 %v2470, %v2470
    %v2481 = vpack.c.bf16 %v2476, %v2476
    %v2482 = vpack.c.bf16 %v2478, %v2478
    %v2483 = vld [vmem:[%s5] sm:$0xf]
    %v2484 = vld [vmem:[%s5 + $0x4] sm:$0xf]
    %v2485 = vld [vmem:[%s5 + $0x8] sm:$0xf]
    %v2486 = vld [vmem:[%s5 + $0xc] sm:$0xf]
    %v2487 = vld [vmem:[%s5 + $0x10] sm:$0xf]
    %v2488 = vld [vmem:[%s5 + $0x14] sm:$0xf]
    %v2489 = vld [vmem:[%s5 + $0x18] sm:$0xf]
    %v2490 = vld [vmem:[%s5 + $0x1c] sm:$0xf]
    %v2491 = vld [vmem:[%s5 + $0x20] sm:$0xf]
    %v2492 = vld [vmem:[%s5 + $0x24] sm:$0xf]
    %v2493 = vld [vmem:[%s5 + $0x28] sm:$0xf]
    %v2494 = vld [vmem:[%s5 + $0x2c] sm:$0xf]
    %v2495 = vld [vmem:[%s5 + $0x30] sm:$0xf]
    %v2496 = vld [vmem:[%s5 + $0x34] sm:$0xf]
    %v2497 = vld [vmem:[%s5 + $0x38] sm:$0xf]
    %v2498 = vld [vmem:[%s5 + $0x3c] sm:$0xf]
    %v2499 = vld [vmem:[%s5 + $0x40] sm:$0xf]
    %v2500 = vld [vmem:[%s5 + $0x44] sm:$0xf]
    %v2501 = vld [vmem:[%s5 + $0x48] sm:$0xf]
    %v2502 = vld [vmem:[%s5 + $0x4c] sm:$0xf]
    %v2503 = vld [vmem:[%s5 + $0x50] sm:$0xf]
    %v2504 = vld [vmem:[%s5 + $0x54] sm:$0xf]
    %v2505 = vld [vmem:[%s5 + $0x58] sm:$0xf]
    %v2506 = vld [vmem:[%s5 + $0x5c] sm:$0xf]
    %v2507 = vld [vmem:[%s5 + $0x60] sm:$0xf]
    %v2508 = vld [vmem:[%s5 + $0x64] sm:$0xf]
    %v2509 = vld [vmem:[%s5 + $0x68] sm:$0xf]
    %v2510 = vld [vmem:[%s5 + $0x6c] sm:$0xf]
    %v2511 = vld [vmem:[%s5 + $0x70] sm:$0xf]
    %v2512 = vld [vmem:[%s5 + $0x74] sm:$0xf]
    %v2513 = vld [vmem:[%s5 + $0x78] sm:$0xf]
    %v2514 = vld [vmem:[%s5 + $0x7c] sm:$0xf]
    %v2515 = vld [vmem:[%s5 + $0x80] sm:$0xf]
    %v2516 = vld [vmem:[%s5 + $0x84] sm:$0xf]
    %v2517 = vld [vmem:[%s5 + $0x88] sm:$0xf]
    %v2518 = vld [vmem:[%s5 + $0x8c] sm:$0xf]
    %v2519 = vld [vmem:[%s5 + $0x90] sm:$0xf]
    %v2520 = vld [vmem:[%s5 + $0x94] sm:$0xf]
    %v2521 = vld [vmem:[%s5 + $0x98] sm:$0xf]
    %v2522 = vld [vmem:[%s5 + $0x9c] sm:$0xf]
    %v2523 = vld [vmem:[%s5 + $0xa0] sm:$0xf]
    %v2524 = vld [vmem:[%s5 + $0xa4] sm:$0xf]
    %v2525 = vld [vmem:[%s5 + $0xa8] sm:$0xf]
    %v2526 = vld [vmem:[%s5 + $0xac] sm:$0xf]
    %v2527 = vld [vmem:[%s5 + $0xb0] sm:$0xf]
    %v2528 = vld [vmem:[%s5 + $0xb4] sm:$0xf]
    %v2529 = vld [vmem:[%s5 + $0xb8] sm:$0xf]
    %v2530 = vld [vmem:[%s5 + $0xbc] sm:$0xf]
    %v2531 = vld [vmem:[%s5 + $0xc0] sm:$0xf]
    %v2532 = vld [vmem:[%s5 + $0xc4] sm:$0xf]
    %v2533 = vld [vmem:[%s5 + $0xc8] sm:$0xf]
    %v2534 = vld [vmem:[%s5 + $0xcc] sm:$0xf]
    %v2535 = vld [vmem:[%s5 + $0xd0] sm:$0xf]
    %v2536 = vld [vmem:[%s5 + $0xd4] sm:$0xf]
    %v2537 = vld [vmem:[%s5 + $0xd8] sm:$0xf]
    %v2538 = vld [vmem:[%s5 + $0xdc] sm:$0xf]
    %v2539 = vld [vmem:[%s5 + $0xe0] sm:$0xf]
    %v2540 = vld [vmem:[%s5 + $0xe4] sm:$0xf]
    %v2541 = vld [vmem:[%s5 + $0xe8] sm:$0xf]
    %v2542 = vld [vmem:[%s5 + $0xec] sm:$0xf]
    %v2543 = vld [vmem:[%s5 + $0xf0] sm:$0xf]
    %v2544 = vld [vmem:[%s5 + $0xf4] sm:$0xf]
    %v2545 = vld [vmem:[%s5 + $0xf8] sm:$0xf]
    %v2546 = vld [vmem:[%s5 + $0xfc] sm:$0xf]
    %v2547 = vld [vmem:[%s6] sm:$0x1]
    %v2549 = vperm.slane %v2547, 0
    %v2615 = vunpack.c.l.b16 %v2483
    %v2616 = vunpack.c.l.b16 %v2484
    %v2617 = vunpack.c.l.b16 %v2485
    %v2618 = vunpack.c.l.b16 %v2486
    %v2619 = vunpack.c.l.b16 %v2487
    %v2620 = vunpack.c.l.b16 %v2488
    %v2621 = vunpack.c.l.b16 %v2489
    %v2622 = vunpack.c.l.b16 %v2490
    %v2623 = vunpack.c.l.b16 %v2491
    %v2624 = vunpack.c.l.b16 %v2492
    %v2625 = vunpack.c.l.b16 %v2493
    %v2626 = vunpack.c.l.b16 %v2494
    %v2627 = vunpack.c.l.b16 %v2495
    %v2628 = vunpack.c.l.b16 %v2496
    %v2629 = vunpack.c.l.b16 %v2497
    %v2630 = vunpack.c.l.b16 %v2498
    %v2631 = vunpack.c.l.b16 %v2499
    %v2632 = vunpack.c.l.b16 %v2500
    %v2633 = vunpack.c.l.b16 %v2501
    %v2634 = vunpack.c.l.b16 %v2502
    %v2635 = vunpack.c.l.b16 %v2503
    %v2636 = vunpack.c.l.b16 %v2504
    %v2637 = vunpack.c.l.b16 %v2505
    %v2638 = vunpack.c.l.b16 %v2506
    %v2639 = vunpack.c.l.b16 %v2507
    %v2640 = vunpack.c.l.b16 %v2508
    %v2641 = vunpack.c.l.b16 %v2509
    %v2642 = vunpack.c.l.b16 %v2510
    %v2643 = vunpack.c.l.b16 %v2511
    %v2644 = vunpack.c.l.b16 %v2512
    %v2645 = vunpack.c.l.b16 %v2513
    %v2646 = vunpack.c.l.b16 %v2514
    %v2647 = vunpack.c.l.b16 %v2515
    %v2648 = vunpack.c.l.b16 %v2516
    %v2649 = vunpack.c.l.b16 %v2517
    %v2650 = vunpack.c.l.b16 %v2518
    %v2651 = vunpack.c.l.b16 %v2519
    %v2652 = vunpack.c.l.b16 %v2520
    %v2653 = vunpack.c.l.b16 %v2521
    %v2654 = vunpack.c.l.b16 %v2522
    %v2655 = vunpack.c.l.b16 %v2523
    %v2656 = vunpack.c.l.b16 %v2524
    %v2657 = vunpack.c.l.b16 %v2525
    %v2658 = vunpack.c.l.b16 %v2526
    %v2659 = vunpack.c.l.b16 %v2527
    %v2660 = vunpack.c.l.b16 %v2528
    %v2661 = vunpack.c.l.b16 %v2529
    %v2662 = vunpack.c.l.b16 %v2530
    %v2663 = vunpack.c.l.b16 %v2531
    %v2664 = vunpack.c.l.b16 %v2532
    %v2665 = vunpack.c.l.b16 %v2533
    %v2666 = vunpack.c.l.b16 %v2534
    %v2667 = vunpack.c.l.b16 %v2535
    %v2668 = vunpack.c.l.b16 %v2536
    %v2669 = vunpack.c.l.b16 %v2537
    %v2670 = vunpack.c.l.b16 %v2538
    %v2671 = vunpack.c.l.b16 %v2539
    %v2672 = vunpack.c.l.b16 %v2540
    %v2673 = vunpack.c.l.b16 %v2541
    %v2674 = vunpack.c.l.b16 %v2542
    %v2675 = vunpack.c.l.b16 %v2543
    %v2676 = vunpack.c.l.b16 %v2544
    %v2677 = vunpack.c.l.b16 %v2545
    %v2678 = vunpack.c.l.b16 %v2546
    %v2679 = vpack.c.b16 %v2616, %v2615
    %v2680 = vpack.c.b16 %v2618, %v2617
    %v2681 = vpack.c.b16 %v2620, %v2619
    %v2682 = vpack.c.b16 %v2622, %v2621
    %v2683 = vpack.c.b16 %v2624, %v2623
    %v2684 = vpack.c.b16 %v2626, %v2625
    %v2685 = vpack.c.b16 %v2628, %v2627
    %v2686 = vpack.c.b16 %v2630, %v2629
    %v2687 = vpack.c.b16 %v2632, %v2631
    %v2688 = vpack.c.b16 %v2634, %v2633
    %v2689 = vpack.c.b16 %v2636, %v2635
    %v2690 = vpack.c.b16 %v2638, %v2637
    %v2691 = vpack.c.b16 %v2640, %v2639
    %v2692 = vpack.c.b16 %v2642, %v2641
    %v2693 = vpack.c.b16 %v2644, %v2643
    %v2694 = vpack.c.b16 %v2646, %v2645
    %v2695 = vpack.c.b16 %v2648, %v2647
    %v2696 = vpack.c.b16 %v2650, %v2649
    %v2697 = vpack.c.b16 %v2652, %v2651
    %v2698 = vpack.c.b16 %v2654, %v2653
    %v2699 = vpack.c.b16 %v2656, %v2655
    %v2700 = vpack.c.b16 %v2658, %v2657
    %v2701 = vpack.c.b16 %v2660, %v2659
    %v2702 = vpack.c.b16 %v2662, %v2661
    %v2703 = vpack.c.b16 %v2664, %v2663
    %v2704 = vpack.c.b16 %v2666, %v2665
    %v2705 = vpack.c.b16 %v2668, %v2667
    %v2706 = vpack.c.b16 %v2670, %v2669
    %v2707 = vpack.c.b16 %v2672, %v2671
    %v2708 = vpack.c.b16 %v2674, %v2673
    %v2709 = vpack.c.b16 %v2676, %v2675
    %v2710 = vpack.c.b16 %v2678, %v2677
    %2743 = vmatpush.bf16.msra.mxu0 %v2686
    %2744 = vmatpush.bf16.msra.mxu0 %v2685
    %2745 = vmatpush.bf16.msra.mxu0 %v2684
    %2746 = vmatpush.bf16.msra.mxu0 %v2683
    %2747 = vmatpush.bf16.msra.mxu0 %v2682
    %2748 = vmatpush.bf16.msra.mxu0 %v2681
    %2749 = vmatpush.bf16.msra.mxu0 %v2680
    %2750 = vmatpush.bf16.msra.mxu0 %v2679
    %2751 = vmatmul.bf16.gmra.mxu0 %v2479
    %v2752 = vpop.f32.mrf.mxu0
    %v2753 = vadd.f32 %v2549, %v2752
    %v2754 = vpop.f32.mrf.mxu0
    %2755 = vdwg.mxu0
    %2756 = vmatpush.bf16.msra.mxu0 %v2694
    %2757 = vmatpush.bf16.msra.mxu0 %v2693
    %2758 = vmatpush.bf16.msra.mxu0 %v2692
    %2759 = vmatpush.bf16.msra.mxu0 %v2691
    %2760 = vmatpush.bf16.msra.mxu0 %v2690
    %2761 = vmatpush.bf16.msra.mxu0 %v2689
    %2762 = vmatpush.bf16.msra.mxu0 %v2688
    %2763 = vmatpush.bf16.msra.mxu0 %v2687
    %2764 = vmatmul.bf16.gmra.mxu0 %v2480
    %v2765 = vpop.f32.mrf.mxu0
    %v2766 = vadd.f32 %v2753, %v2765
    %v2767 = vpop.f32.mrf.mxu0
    %2768 = vdwg.mxu0
    %2769 = vmatpush.bf16.msra.mxu0 %v2702
    %2770 = vmatpush.bf16.msra.mxu0 %v2701
    %2771 = vmatpush.bf16.msra.mxu0 %v2700
    %2772 = vmatpush.bf16.msra.mxu0 %v2699
    %2773 = vmatpush.bf16.msra.mxu0 %v2698
    %2774 = vmatpush.bf16.msra.mxu0 %v2697
    %2775 = vmatpush.bf16.msra.mxu0 %v2696
    %2776 = vmatpush.bf16.msra.mxu0 %v2695
    %2777 = vmatmul.bf16.gmra.mxu0 %v2481
    %v2778 = vpop.f32.mrf.mxu0
    %v2779 = vadd.f32 %v2766, %v2778
    %v2780 = vpop.f32.mrf.mxu0
    %2781 = vdwg.mxu0
    %2782 = vmatpush.bf16.msra.mxu0 %v2710
    %2783 = vmatpush.bf16.msra.mxu0 %v2709
    %2784 = vmatpush.bf16.msra.mxu0 %v2708
    %2785 = vmatpush.bf16.msra.mxu0 %v2707
    %2786 = vmatpush.bf16.msra.mxu0 %v2706
    %2787 = vmatpush.bf16.msra.mxu0 %v2705
    %2788 = vmatpush.bf16.msra.mxu0 %v2704
    %2789 = vmatpush.bf16.msra.mxu0 %v2703
    %2790 = vmatmul.bf16.gmra.mxu0 %v2482
    %v2791 = vpop.f32.mrf.mxu0
    %v2792 = vadd.f32 %v2779, %v2791
    %v2793 = vpop.f32.mrf.mxu0
    %2794 = vdwg.mxu0
    %v2795 = vmax.f32 %v2792, 0.0
    %v2796 = vpack.c.bf16 %v2795, %v2795
    %v2797 = vld [vmem:[%s7] sm:$0xf]
    %v2798 = vld [vmem:[%s7 + $0x4] sm:$0xf]
    %v2799 = vld [vmem:[%s7 + $0x8] sm:$0xf]
    %v2800 = vld [vmem:[%s7 + $0xc] sm:$0xf]
    %v2801 = vld [vmem:[%s7 + $0x10] sm:$0xf]
    %v2802 = vld [vmem:[%s7 + $0x14] sm:$0xf]
    %v2803 = vld [vmem:[%s7 + $0x18] sm:$0xf]
    %v2804 = vld [vmem:[%s7 + $0x1c] sm:$0xf]
    %v2805 = vld [vmem:[%s7 + $0x20] sm:$0xf]
    %v2806 = vld [vmem:[%s7 + $0x24] sm:$0xf]
    %v2807 = vld [vmem:[%s7 + $0x28] sm:$0xf]
    %v2808 = vld [vmem:[%s7 + $0x2c] sm:$0xf]
    %v2809 = vld [vmem:[%s7 + $0x30] sm:$0xf]
    %v2810 = vld [vmem:[%s7 + $0x34] sm:$0xf]
    %v2811 = vld [vmem:[%s7 + $0x38] sm:$0xf]
    %v2812 = vld [vmem:[%s7 + $0x3c] sm:$0xf]
    %v2813 = vld [vmem:[%s8] sm:$0x1]
    %v2815 = vperm.slane %v2813, 0
    %v2833 = vunpack.c.l.b16 %v2797
    %v2834 = vunpack.c.l.b16 %v2798
    %v2835 = vunpack.c.l.b16 %v2799
    %v2836 = vunpack.c.l.b16 %v2800
    %v2837 = vunpack.c.l.b16 %v2801
    %v2838 = vunpack.c.l.b16 %v2802
    %v2839 = vunpack.c.l.b16 %v2803
    %v2840 = vunpack.c.l.b16 %v2804
    %v2841 = vunpack.c.l.b16 %v2805
    %v2842 = vunpack.c.l.b16 %v2806
    %v2843 = vunpack.c.l.b16 %v2807
    %v2844 = vunpack.c.l.b16 %v2808
    %v2845 = vunpack.c.l.b16 %v2809
    %v2846 = vunpack.c.l.b16 %v2810
    %v2847 = vunpack.c.l.b16 %v2811
    %v2848 = vunpack.c.l.b16 %v2812
    %v2849 = vpack.c.b16 %v2834, %v2833
    %v2850 = vpack.c.b16 %v2836, %v2835
    %v2851 = vpack.c.b16 %v2838, %v2837
    %v2852 = vpack.c.b16 %v2840, %v2839
    %v2853 = vpack.c.b16 %v2842, %v2841
    %v2854 = vpack.c.b16 %v2844, %v2843
    %v2855 = vpack.c.b16 %v2846, %v2845
    %v2856 = vpack.c.b16 %v2848, %v2847
    %2865 = vmatpush.bf16.msra.mxu0 %v2856
    %2866 = vmatpush.bf16.msra.mxu0 %v2855
    %2867 = vmatpush.bf16.msra.mxu0 %v2854
    %2868 = vmatpush.bf16.msra.mxu0 %v2853
    %2869 = vmatpush.bf16.msra.mxu0 %v2852
    %2870 = vmatpush.bf16.msra.mxu0 %v2851
    %2871 = vmatpush.bf16.msra.mxu0 %v2850
    %2872 = vmatpush.bf16.msra.mxu0 %v2849
    %2873 = vmatmul.bf16.gmra.mxu0 %v2796
    %v2874 = vpop.f32.mrf.mxu0
    %v2875 = vadd.f32 %v2815, %v2874
    %v2876 = vpop.f32.mrf.mxu0
    %2877 = vdwg.mxu0
    %v2878 = vsel %vm682, %v2875, -inf
    %2879 = vmax.xlane.f32.xlu0 %v2878
    %v2880 = vpop.xlane.xlu0 %2879
    %v2881 = vsub.f32 %v2875, %v2880
    %v2882 = vmul.f32 %v2881, 1.442695
    %v2883 = vpow.pop %v2882
    %v2884 = vsel %vm682, %v2883, 0.0
    %2885 = vadd.xlane.f32.xlu0 %v2884
    %v2886 = vpop.xlane.xlu0 %2885
    %v2887 = vlog2.pop %v2886
    %v2888 = vmul.f32 %v2887, 0.6931472
    %v2889 = vsub.f32 %v2881, %v2888
    %2890 = vst [vmem:[#allocation2] sm:$0x3] %v2889
    // Predicated region
    $region38: #{red_neuronal_forward.1} parent=1 // pred_check
      _
    $region39: #{red_neuronal_forward.1} parent=1 // pred_check_branch
      %2892 = sbr.rel (0) target = $region41
    $region40: #{red_neuronal_forward.1} parent=1 // pred_region
      %2894 = vsyncadd [#allocation3], 0
      %s2896 = sshll.u32 [#allocation2], 4
      %s2897 = int_to_ptr.vmem [resolvable:$true] %s2896
      %s2898 = sshll.u32 %s9, 4
      %s2899 = int_to_ptr.hbm [resolvable:$true] %s2898
      %2901 = dma.vmem_to_hbm [thread:$0]  %s2897, 32, %s2899, [#allocation3]
    $region41: #{red_neuronal_forward.1} parent=1 // pred_fallthru
      _
    // Predicated region
    $region42: #{red_neuronal_forward.1} parent=1 // pred_check
      _
    $region43: #{red_neuronal_forward.1} parent=1 // pred_check_branch
      %2903 = sbr.rel (0) target = $region45
    $region44: #{red_neuronal_forward.1} parent=1 // pred_region
      %2905 = dma.done [#allocation3], 32
    $region45: #{red_neuronal_forward.1} parent=1 // pred_fallthru
      _
    %2906 = vsyncpa [#allocation3], 1

</llo_original>
